<compile_context>
chip_gen: v6e
topology: v6e:2x2x1
jax: 0.10.0
libtpu: 0.0.40
codegen_flags: <defaults>
</compile_context>

<pallas_src>
import functools

import jax
import jax.numpy as jnp
from jax import lax
from jax.experimental import pallas as pl
from jax.experimental.pallas import tpu as pltpu


def _round_up(x, m):
    return ((x + m - 1) // m) * m


# ----------------------------------------------------------------------------
# Fully fused RND kernel: tokens -> one-hot -> Linear -> [ReLU -> Linear]*L -> Linear
# Both networks (target || predictor) are served by one call via block-diag packing.
# ----------------------------------------------------------------------------
def _rnd_fused_mlp_kernel(tok_ref, w_in_ref, b_in_ref, w_h_ref, b_h_ref,
                          w_out_ref, b_out_ref, o_ref,
                          *, num_tokens, max_len, num_layers):
    TB = tok_ref.shape[0]
    d_in_pad = w_in_ref.shape[0]

    # ---- Fused first layer: build the flattened one-hot in-register (no HBM one-hot).
    tokens = tok_ref[...]                                      # (TB, max_len) int32
    col = lax.broadcasted_iota(jnp.int32, (TB, d_in_pad), 1)   # lane (= flat one-hot) index
    hit_any = None
    for p in range(max_len):                                   # static unroll; max_len small
        hit = col == (tokens[:, p:p + 1] + p * num_tokens)     # (TB, d_in_pad) bool
        hit_any = hit if hit_any is None else (hit_any | hit)
    onehot = jnp.where(hit_any, 1.0, 0.0).astype(jnp.bfloat16)  # exact 0/1 in bf16

    h = (jnp.dot(onehot, w_in_ref[...], preferred_element_type=jnp.float32)
         + b_in_ref[...])                                       # (TB, F2_pad) f32

    # ---- Hidden layers (target||predictor block-diagonal; zero blocks => no cross-talk).
    b_h = b_h_ref[...]                                          # (L, F2_pad) read once
    for l in range(num_layers):                                 # static unroll
        h = jnp.maximum(h, 0.0)                                 # f32 elementwise tail (v5e-safe)
        h = (jnp.dot(h.astype(jnp.bfloat16), w_h_ref[l],
                     preferred_element_type=jnp.float32) + b_h[l:l + 1, :])

    # ---- Output layer: lane-dense store (width padded to a multiple of 128).
    o_ref[...] = (jnp.dot(h.astype(jnp.bfloat16), w_out_ref[...],
                          preferred_element_type=jnp.float32) + b_out_ref[...])


# ----------------------------------------------------------------------------
# Parameter init (PyTorch nn.Linear-style: uniform +/- 1/sqrt(fan_in))
# ----------------------------------------------------------------------------
def init_gfnmlp_params(key, num_tokens, num_outputs, num_hid, num_layers, max_len):
    d_in = num_tokens * max_len

    def linear(k, fan_in, fan_out):
        bound = 1.0 / (fan_in ** 0.5)
        kw, kb = jax.random.split(k)
        w = jax.random.uniform(kw, (fan_in, fan_out), jnp.float32, -bound, bound)
        b = jax.random.uniform(kb, (1, fan_out), jnp.float32, -bound, bound)
        return w, b

    keys = jax.random.split(key, num_layers + 2)
    w_in, b_in = linear(keys[0], d_in, num_hid)
    w_hs, b_hs = [], []
    for i in range(num_layers):
        w, b = linear(keys[1 + i], num_hid, num_hid)
        w_hs.append(w)
        b_hs.append(b)
    w_h = jnp.stack(w_hs, axis=0)            # (L, H, H)
    b_h = jnp.concatenate(b_hs, axis=0)      # (L, H)
    w_out, b_out = linear(keys[-1], num_hid, num_outputs)
    return (w_in, b_in, w_h, b_h, w_out, b_out)


# ----------------------------------------------------------------------------
# Pack target + predictor networks into one padded, block-diagonal parameter set.
# All matmul widths are padded to multiples of 128 (lane-dense, (8,128)-tile friendly).
# NOTE: block-diag packing is the right call for small H (<~64-128) — it fills lanes
# that would otherwise be empty. For large H, two dense halves (2, L, H, H) with two
# half-width dots per layer would halve MXU FLOPs and weight VMEM.
# ----------------------------------------------------------------------------
def pack_rnd_params(target_params, predictor_params):
    wi_t, bi_t, wh_t, bh_t, wo_t, bo_t = target_params
    wi_p, bi_p, wh_p, bh_p, wo_p, bo_p = predictor_params
    d_in, H = wi_t.shape
    L = wh_t.shape[0]
    d_out = wo_t.shape[1]

    d_in_pad = _round_up(d_in, 128)
    F2 = 2 * H
    F2_pad = _round_up(F2, 128)
    d_out2_pad = _round_up(2 * d_out, 128)

    # Input layer: target occupies cols [0,H), predictor cols [H,2H); rest is zero pad.
    w_in = jnp.zeros((d_in_pad, F2_pad), jnp.float32)
    w_in = w_in.at[:d_in, :H].set(wi_t).at[:d_in, H:F2].set(wi_p)
    b_in = jnp.zeros((1, F2_pad), jnp.float32)
    b_in = b_in.at[:, :H].set(bi_t).at[:, H:F2].set(bi_p)

    # Hidden layers: block-diagonal (exact zeros => no target/predictor cross-talk).
    w_h = jnp.zeros((L, F2_pad, F2_pad), jnp.float32)
    w_h = w_h.at[:, :H, :H].set(wh_t).at[:, H:F2, H:F2].set(wh_p)
    b_h = jnp.zeros((L, F2_pad), jnp.float32)
    b_h = b_h.at[:, :H].set(bh_t).at[:, H:F2].set(bh_p)

    # Output layer: lane-dense width (multiple of 128); real cols are [0, 2*d_out).
    w_out = jnp.zeros((F2_pad, d_out2_pad), jnp.float32)
    w_out = w_out.at[:H, :d_out].set(wo_t).at[H:F2, d_out:2 * d_out].set(wo_p)
    b_out = jnp.zeros((1, d_out2_pad), jnp.float32)
    b_out = b_out.at[:, :d_out].set(bo_t).at[:, d_out:2 * d_out].set(bo_p)

    # bf16 weights for the MXU path; biases (elementwise path) stay f32.
    return (w_in.astype(jnp.bfloat16), b_in,
            w_h.astype(jnp.bfloat16), b_h,
            w_out.astype(jnp.bfloat16), b_out)


# ----------------------------------------------------------------------------
# RND forward (equivalent of RND.forward)
# ----------------------------------------------------------------------------
def rnd_forward(next_state, lens, packed_params, num_tokens, num_outputs,
                num_layers, block_b=512, single_buffer_weights=True):
    """Returns (random_phi_s_next, predicted_phi_s_next), each (B, num_outputs) f32."""
    # TODO(synk): `lens` is unused — the flattened one-hot MLP consumes the full
    # padded sequence, matching the dense GFNMLP.forward_rnd(return_all=True).
    w_in, b_in, w_h, b_h, w_out, b_out = packed_params
    B, max_len = next_state.shape
    d_in_pad, F2_pad = w_in.shape
    d_out2_pad = w_out.shape[1]
    L = w_h.shape[0]

    # Batch tile: multiple of 8 sublanes, >= 2 grid steps whenever B > 8 (so the
    # "parallel" axis shards across both v7x TensorCores), capped at block_b
    # (mem-bound roofline plateaus around 512-1024 rows).
    TB = max(8, min(block_b, _round_up(pl.cdiv(B, 2), 8)))
    B_pad = _round_up(B, TB)
    ns = next_state.astype(jnp.int32)
    if B_pad != B:
        ns = jnp.pad(ns, ((0, B_pad - B), (0, 0)))
    grid = (B_pad // TB,)

    kernel = functools.partial(_rnd_fused_mlp_kernel, num_tokens=num_tokens,
                               max_len=max_len, num_layers=num_layers)

    # Constant-index weight/bias specs: request single buffering (they are fetched once).
    if single_buffer_weights:
        wspec = functools.partial(pl.BlockSpec, pipeline_mode=pl.Buffered(1))
    else:
        wspec = pl.BlockSpec

    # Advisory cost estimate so XLA schedules surrounding ops (pad/slice) sensibly.
    flops = 2 * B_pad * (d_in_pad * F2_pad + L * F2_pad * F2_pad + F2_pad * d_out2_pad)
    bytes_accessed = (B_pad * max_len * 4
                      + (w_in.size + w_h.size + w_out.size) * 2
                      + (b_in.size + b_h.size + b_out.size) * 4
                      + B_pad * d_out2_pad * 4)

    # VMEM budget: token tiles + output tiles (double-buffered) + resident weights.
    vmem_bytes = (2 * TB * max_len * 4
                  + (w_in.size + w_h.size + w_out.size) * 2
                  + (b_in.size + b_h.size + b_out.size) * 4
                  + 2 * TB * d_out2_pad * 4)
    vmem_limit = int(min(max(4 * vmem_bytes, 32 << 20), 60 << 20))  # v7x-safe cap

    out = pl.pallas_call(
        kernel,
        out_shape=jax.ShapeDtypeStruct((B_pad, d_out2_pad), jnp.float32),
        grid=grid,
        in_specs=[
            pl.BlockSpec((TB, max_len), lambda i: (i, 0)),   # tokens: batch-tiled
            wspec(w_in.shape, lambda i: (0, 0)),             # weights: VMEM-resident
            wspec(b_in.shape, lambda i: (0, 0)),
            wspec(w_h.shape, lambda i: (0, 0, 0)),
            wspec(b_h.shape, lambda i: (0, 0)),
            wspec(w_out.shape, lambda i: (0, 0)),
            wspec(b_out.shape, lambda i: (0, 0)),
        ],
        out_specs=pl.BlockSpec((TB, d_out2_pad), lambda i: (i, 0)),  # lane-dense slab
        compiler_params=pltpu.CompilerParams(
            dimension_semantics=("parallel",),               # megacore sharding on v7x
            vmem_limit_bytes=vmem_limit),
        cost_estimate=pl.CostEstimate(flops=flops, transcendentals=0,
                                      bytes_accessed=bytes_accessed),
    )(ns, w_in, b_in, w_h, b_h, w_out, b_out)

    out = out[:B]
    return out[:, :num_outputs], out[:, num_outputs:2 * num_outputs]


# ----------------------------------------------------------------------------
# Pure-JAX reference (unpacked f32) for correctness check
# ----------------------------------------------------------------------------
def _reference_mlp(x_onehot, params, num_layers):
    w_in, b_in, w_h, b_h, w_out, b_out = params
    h = x_onehot @ w_in + b_in
    for l in range(num_layers):
        h = jnp.maximum(h, 0.0)
        h = h @ w_h[l] + b_h[l:l + 1, :]
    return h @ w_out + b_out


if __name__ == "__main__":
    # Small shapes consistent with the module's constructor arguments.
    num_tokens = 4
    num_outputs = 16
    rnd_num_hidden = 32
    rnd_num_layers = 2
    max_len = 8
    batch = 8

    root = jax.random.PRNGKey(0)
    k_state, k_target, k_pred = jax.random.split(root, 3)

    next_state = jax.random.randint(k_state, (batch, max_len), 0, num_tokens,
                                    dtype=jnp.int32)
    lens = jnp.full((batch,), max_len, dtype=jnp.int32)

    target_params = init_gfnmlp_params(
        k_target, num_tokens, num_outputs, rnd_num_hidden, rnd_num_layers, max_len)
    predictor_params = init_gfnmlp_params(
        k_pred, num_tokens, num_outputs, rnd_num_hidden, rnd_num_layers, max_len)
    packed_params = pack_rnd_params(target_params, predictor_params)

    def make_fwd(single_buffer_weights):
        return jax.jit(functools.partial(
            rnd_forward, num_tokens=num_tokens, num_outputs=num_outputs,
            num_layers=rnd_num_layers,
            single_buffer_weights=single_buffer_weights))

    try:
        fwd = make_fwd(True)
        random_phi, predicted_phi = fwd(next_state, lens, packed_params)
        jax.block_until_ready((random_phi, predicted_phi))
    except Exception:
        # TODO(synk): pl.Buffered(1) (single-buffered resident weights) unsupported on
        # this JAX build; fall back to default double-buffered constant-index specs.
        fwd = make_fwd(False)
        random_phi, predicted_phi = fwd(next_state, lens, packed_params)
        jax.block_until_ready((random_phi, predicted_phi))

    assert random_phi.shape == (batch, num_outputs)
    assert predicted_phi.shape == (batch, num_outputs)
    assert random_phi.dtype == jnp.float32 and predicted_phi.dtype == jnp.float32

    # Correctness vs. plain-JAX f32 reference (kernel uses bf16 matmul operands).
    x_onehot = jax.nn.one_hot(next_state, num_tokens,
                              dtype=jnp.float32).reshape(batch, -1)
    ref_t = _reference_mlp(x_onehot, target_params, rnd_num_layers)
    ref_p = _reference_mlp(x_onehot, predictor_params, rnd_num_layers)
    assert jnp.allclose(random_phi, ref_t, atol=5e-2, rtol=5e-2)
    assert jnp.allclose(predicted_phi, ref_p, atol=5e-2, rtol=5e-2)

    print("KERNEL_OK")
</pallas_src>

<mosaic_0001>
module attributes {stable_mosaic.version = 11 : i64} {
  func.func @_rnd_fused_mlp_kernel(%arg0: i32, %arg1: memref<8x8xi32, #tpu.memory_space<vmem>>, %arg2: memref<128x128xbf16, #tpu.memory_space<vmem>>, %arg3: memref<1x128xf32, #tpu.memory_space<vmem>>, %arg4: memref<2x128x128xbf16, #tpu.memory_space<vmem>>, %arg5: memref<2x128xf32, #tpu.memory_space<vmem>>, %arg6: memref<128x128xbf16, #tpu.memory_space<vmem>>, %arg7: memref<1x128xf32, #tpu.memory_space<vmem>>, %arg8: memref<8x128xf32, #tpu.memory_space<vmem>>) attributes {dimension_semantics = [#tpu.dimension_semantics<parallel>], iteration_bounds = array<i64: 1>, scalar_prefetch = 0 : i64, scratch_operands = 0 : i64, tpu.core_type = #tpu.core_type<tc>, window_params = [{transform_indices = @transform_0, window_bounds = array<i64: 8, 8>}, {pipeline_mode = #tpu.pipeline_mode<synchronous>, transform_indices = @transform_1, window_bounds = array<i64: 128, 128>}, {pipeline_mode = #tpu.pipeline_mode<synchronous>, transform_indices = @transform_2, window_bounds = array<i64: 1, 128>}, {pipeline_mode = #tpu.pipeline_mode<synchronous>, transform_indices = @transform_3, window_bounds = array<i64: 2, 128, 128>}, {pipeline_mode = #tpu.pipeline_mode<synchronous>, transform_indices = @transform_4, window_bounds = array<i64: 2, 128>}, {pipeline_mode = #tpu.pipeline_mode<synchronous>, transform_indices = @transform_5, window_bounds = array<i64: 128, 128>}, {pipeline_mode = #tpu.pipeline_mode<synchronous>, transform_indices = @transform_6, window_bounds = array<i64: 1, 128>}, {transform_indices = @transform_7, window_bounds = array<i64: 8, 128>}]} {
    %c0 = arith.constant 0 : index
    %c0_0 = arith.constant 0 : index
    %0 = vector.load %arg1[%c0, %c0_0] : memref<8x8xi32, #tpu.memory_space<vmem>>, vector<8x8xi32>
    %1 = tpu.iota {dimensions = array<i32: 1>} : vector<8x128xi32>
    %2 = vector.extract_strided_slice %0 {offsets = [0, 0], sizes = [8, 1], strides = [1, 1]} : vector<8x8xi32> to vector<8x1xi32>
    %c0_i32 = arith.constant 0 : i32
    %3 = vector.broadcast %c0_i32 : i32 to vector<8x1xi32>
    %4 = arith.addi %2, %3 : vector<8x1xi32>
    %5 = vector.broadcast %4 : vector<8x1xi32> to vector<8x128xi32>
    %6 = arith.cmpi eq, %1, %5 : vector<8x128xi32>
    %7 = vector.extract_strided_slice %0 {offsets = [0, 1], sizes = [8, 1], strides = [1, 1]} : vector<8x8xi32> to vector<8x1xi32>
    %c4_i32 = arith.constant 4 : i32
    %8 = vector.broadcast %c4_i32 : i32 to vector<8x1xi32>
    %9 = arith.addi %7, %8 : vector<8x1xi32>
    %10 = vector.broadcast %9 : vector<8x1xi32> to vector<8x128xi32>
    %11 = arith.cmpi eq, %1, %10 : vector<8x128xi32>
    %12 = arith.ori %6, %11 : vector<8x128xi1>
    %13 = vector.extract_strided_slice %0 {offsets = [0, 2], sizes = [8, 1], strides = [1, 1]} : vector<8x8xi32> to vector<8x1xi32>
    %c8_i32 = arith.constant 8 : i32
    %14 = vector.broadcast %c8_i32 : i32 to vector<8x1xi32>
    %15 = arith.addi %13, %14 : vector<8x1xi32>
    %16 = vector.broadcast %15 : vector<8x1xi32> to vector<8x128xi32>
    %17 = arith.cmpi eq, %1, %16 : vector<8x128xi32>
    %18 = arith.ori %12, %17 : vector<8x128xi1>
    %19 = vector.extract_strided_slice %0 {offsets = [0, 3], sizes = [8, 1], strides = [1, 1]} : vector<8x8xi32> to vector<8x1xi32>
    %c12_i32 = arith.constant 12 : i32
    %20 = vector.broadcast %c12_i32 : i32 to vector<8x1xi32>
    %21 = arith.addi %19, %20 : vector<8x1xi32>
    %22 = vector.broadcast %21 : vector<8x1xi32> to vector<8x128xi32>
    %23 = arith.cmpi eq, %1, %22 : vector<8x128xi32>
    %24 = arith.ori %18, %23 : vector<8x128xi1>
    %25 = vector.extract_strided_slice %0 {offsets = [0, 4], sizes = [8, 1], strides = [1, 1]} : vector<8x8xi32> to vector<8x1xi32>
    %c16_i32 = arith.constant 16 : i32
    %26 = vector.broadcast %c16_i32 : i32 to vector<8x1xi32>
    %27 = arith.addi %25, %26 : vector<8x1xi32>
    %28 = vector.broadcast %27 : vector<8x1xi32> to vector<8x128xi32>
    %29 = arith.cmpi eq, %1, %28 : vector<8x128xi32>
    %30 = arith.ori %24, %29 : vector<8x128xi1>
    %31 = vector.extract_strided_slice %0 {offsets = [0, 5], sizes = [8, 1], strides = [1, 1]} : vector<8x8xi32> to vector<8x1xi32>
    %c20_i32 = arith.constant 20 : i32
    %32 = vector.broadcast %c20_i32 : i32 to vector<8x1xi32>
    %33 = arith.addi %31, %32 : vector<8x1xi32>
    %34 = vector.broadcast %33 : vector<8x1xi32> to vector<8x128xi32>
    %35 = arith.cmpi eq, %1, %34 : vector<8x128xi32>
    %36 = arith.ori %30, %35 : vector<8x128xi1>
    %37 = vector.extract_strided_slice %0 {offsets = [0, 6], sizes = [8, 1], strides = [1, 1]} : vector<8x8xi32> to vector<8x1xi32>
    %c24_i32 = arith.constant 24 : i32
    %38 = vector.broadcast %c24_i32 : i32 to vector<8x1xi32>
    %39 = arith.addi %37, %38 : vector<8x1xi32>
    %40 = vector.broadcast %39 : vector<8x1xi32> to vector<8x128xi32>
    %41 = arith.cmpi eq, %1, %40 : vector<8x128xi32>
    %42 = arith.ori %36, %41 : vector<8x128xi1>
    %43 = vector.extract_strided_slice %0 {offsets = [0, 7], sizes = [8, 1], strides = [1, 1]} : vector<8x8xi32> to vector<8x1xi32>
    %c28_i32 = arith.constant 28 : i32
    %44 = vector.broadcast %c28_i32 : i32 to vector<8x1xi32>
    %45 = arith.addi %43, %44 : vector<8x1xi32>
    %46 = vector.broadcast %45 : vector<8x1xi32> to vector<8x128xi32>
    %47 = arith.cmpi eq, %1, %46 : vector<8x128xi32>
    %48 = arith.ori %42, %47 : vector<8x128xi1>
    %cst = arith.constant 1.000000e+00 : f32
    %cst_1 = arith.constant 0.000000e+00 : f32
    %49 = vector.broadcast %cst : f32 to vector<8x128xf32>
    %50 = vector.broadcast %cst_1 : f32 to vector<8x128xf32>
    %51 = arith.select %48, %49, %50 : vector<8x128xi1>, vector<8x128xf32>
    %52 = arith.truncf %51 : vector<8x128xf32> to vector<8x128xbf16>
    %c0_2 = arith.constant 0 : index
    %c0_3 = arith.constant 0 : index
    %53 = vector.load %arg2[%c0_2, %c0_3] : memref<128x128xbf16, #tpu.memory_space<vmem>>, vector<128x128xbf16>
    %cst_4 = arith.constant dense<0.000000e+00> : vector<8x128xf32>
    %54 = tpu.matmul %52, %53, %cst_4 {dimension_numbers = #tpu.dot_dimension_numbers<[1], [0], [0], [1], [0, 0, 1, 1], [], []>} : vector<8x128xbf16>, vector<128x128xbf16>, vector<8x128xf32> -> vector<8x128xf32>
    %c0_5 = arith.constant 0 : index
    %c0_6 = arith.constant 0 : index
    %55 = vector.load %arg3[%c0_5, %c0_6] : memref<1x128xf32, #tpu.memory_space<vmem>>, vector<1x128xf32>
    %56 = vector.broadcast %55 : vector<1x128xf32> to vector<8x128xf32>
    %57 = arith.addf %54, %56 : vector<8x128xf32>
    %c0_7 = arith.constant 0 : index
    %c0_8 = arith.constant 0 : index
    %58 = vector.load %arg5[%c0_7, %c0_8] : memref<2x128xf32, #tpu.memory_space<vmem>>, vector<2x128xf32>
    %cst_9 = arith.constant 0.000000e+00 : f32
    %59 = vector.broadcast %cst_9 : f32 to vector<8x128xf32>
    %60 = arith.maximumf %57, %59 : vector<8x128xf32>
    %61 = arith.truncf %60 : vector<8x128xf32> to vector<8x128xbf16>
    %c0_10 = arith.constant 0 : index
    %c0_11 = arith.constant 0 : index
    %c0_12 = arith.constant 0 : index
    %62 = vector.load %arg4[%c0_10, %c0_11, %c0_12] : memref<2x128x128xbf16, #tpu.memory_space<vmem>>, vector<1x128x128xbf16>
    %63 = vector.shape_cast %62 : vector<1x128x128xbf16> to vector<128x128xbf16>
    %cst_13 = arith.constant dense<0.000000e+00> : vector<8x128xf32>
    %64 = tpu.matmul %61, %63, %cst_13 {dimension_numbers = #tpu.dot_dimension_numbers<[1], [0], [0], [1], [0, 0, 1, 1], [], []>} : vector<8x128xbf16>, vector<128x128xbf16>, vector<8x128xf32> -> vector<8x128xf32>
    %65 = vector.extract_strided_slice %58 {offsets = [0, 0], sizes = [1, 128], strides = [1, 1]} : vector<2x128xf32> to vector<1x128xf32>
    %66 = vector.broadcast %65 : vector<1x128xf32> to vector<8x128xf32>
    %67 = arith.addf %64, %66 : vector<8x128xf32>
    %cst_14 = arith.constant 0.000000e+00 : f32
    %68 = vector.broadcast %cst_14 : f32 to vector<8x128xf32>
    %69 = arith.maximumf %67, %68 : vector<8x128xf32>
    %70 = arith.truncf %69 : vector<8x128xf32> to vector<8x128xbf16>
    %c1 = arith.constant 1 : index
    %c0_15 = arith.constant 0 : index
    %c0_16 = arith.constant 0 : index
    %71 = vector.load %arg4[%c1, %c0_15, %c0_16] : memref<2x128x128xbf16, #tpu.memory_space<vmem>>, vector<1x128x128xbf16>
    %72 = vector.shape_cast %71 : vector<1x128x128xbf16> to vector<128x128xbf16>
    %cst_17 = arith.constant dense<0.000000e+00> : vector<8x128xf32>
    %73 = tpu.matmul %70, %72, %cst_17 {dimension_numbers = #tpu.dot_dimension_numbers<[1], [0], [0], [1], [0, 0, 1, 1], [], []>} : vector<8x128xbf16>, vector<128x128xbf16>, vector<8x128xf32> -> vector<8x128xf32>
    %74 = vector.extract_strided_slice %58 {offsets = [1, 0], sizes = [1, 128], strides = [1, 1]} : vector<2x128xf32> to vector<1x128xf32>
    %75 = vector.broadcast %74 : vector<1x128xf32> to vector<8x128xf32>
    %76 = arith.addf %73, %75 : vector<8x128xf32>
    %77 = arith.truncf %76 : vector<8x128xf32> to vector<8x128xbf16>
    %c0_18 = arith.constant 0 : index
    %c0_19 = arith.constant 0 : index
    %78 = vector.load %arg6[%c0_18, %c0_19] : memref<128x128xbf16, #tpu.memory_space<vmem>>, vector<128x128xbf16>
    %cst_20 = arith.constant dense<0.000000e+00> : vector<8x128xf32>
    %79 = tpu.matmul %77, %78, %cst_20 {dimension_numbers = #tpu.dot_dimension_numbers<[1], [0], [0], [1], [0, 0, 1, 1], [], []>} : vector<8x128xbf16>, vector<128x128xbf16>, vector<8x128xf32> -> vector<8x128xf32>
    %c0_21 = arith.constant 0 : index
    %c0_22 = arith.constant 0 : index
    %80 = vector.load %arg7[%c0_21, %c0_22] : memref<1x128xf32, #tpu.memory_space<vmem>>, vector<1x128xf32>
    %81 = vector.broadcast %80 : vector<1x128xf32> to vector<8x128xf32>
    %82 = arith.addf %79, %81 : vector<8x128xf32>
    %c0_23 = arith.constant 0 : index
    %c0_24 = arith.constant 0 : index
    %83 = vector.load %arg8[%c0_23, %c0_24] : memref<8x128xf32, #tpu.memory_space<vmem>>, vector<8x128xf32>
    tpu.vector_store %arg8[%c0_23, %c0_24], %82 {strides = array<i32>} : memref<8x128xf32, #tpu.memory_space<vmem>>, vector<8x128xf32>,
    return
  }
  func.func @transform_0(%arg0: i32) -> (i32, i32) {
    %c0_i32 = arith.constant 0 : i32
    %c0_i32_0 = arith.constant 0 : i32
    return %arg0, %c0_i32 : i32, i32
  }
  func.func @transform_1(%arg0: i32) -> (i32, i32) {
    %c0_i32 = arith.constant 0 : i32
    %c0_i32_0 = arith.constant 0 : i32
    %c0_i32_1 = arith.constant 0 : i32
    return %c0_i32, %c0_i32_0 : i32, i32
  }
  func.func @transform_2(%arg0: i32) -> (i32, i32) {
    %c0_i32 = arith.constant 0 : i32
    %c0_i32_0 = arith.constant 0 : i32
    %c0_i32_1 = arith.constant 0 : i32
    return %c0_i32, %c0_i32_0 : i32, i32
  }
  func.func @transform_3(%arg0: i32) -> (i32, i32, i32) {
    %c0_i32 = arith.constant 0 : i32
    %c0_i32_0 = arith.constant 0 : i32
    %c0_i32_1 = arith.constant 0 : i32
    %c0_i32_2 = arith.constant 0 : i32
    return %c0_i32, %c0_i32_0, %c0_i32_1 : i32, i32, i32
  }
  func.func @transform_4(%arg0: i32) -> (i32, i32) {
    %c0_i32 = arith.constant 0 : i32
    %c0_i32_0 = arith.constant 0 : i32
    %c0_i32_1 = arith.constant 0 : i32
    return %c0_i32, %c0_i32_0 : i32, i32
  }
  func.func @transform_5(%arg0: i32) -> (i32, i32) {
    %c0_i32 = arith.constant 0 : i32
    %c0_i32_0 = arith.constant 0 : i32
    %c0_i32_1 = arith.constant 0 : i32
    return %c0_i32, %c0_i32_0 : i32, i32
  }
  func.func @transform_6(%arg0: i32) -> (i32, i32) {
    %c0_i32 = arith.constant 0 : i32
    %c0_i32_0 = arith.constant 0 : i32
    %c0_i32_1 = arith.constant 0 : i32
    return %c0_i32, %c0_i32_0 : i32, i32
  }
  func.func @transform_7(%arg0: i32) -> (i32, i32) {
    %c0_i32 = arith.constant 0 : i32
    %c0_i32_0 = arith.constant 0 : i32
    return %arg0, %c0_i32 : i32, i32
  }
}

module attributes {stable_mosaic.version = 11 : i64} {
  func.func @_rnd_fused_mlp_kernel(%arg0: i32, %arg1: memref<8x8xi32, #tpu.memory_space<vmem>>, %arg2: memref<128x128xbf16, #tpu.memory_space<vmem>>, %arg3: memref<1x128xf32, #tpu.memory_space<vmem>>, %arg4: memref<2x128x128xbf16, #tpu.memory_space<vmem>>, %arg5: memref<2x128xf32, #tpu.memory_space<vmem>>, %arg6: memref<128x128xbf16, #tpu.memory_space<vmem>>, %arg7: memref<1x128xf32, #tpu.memory_space<vmem>>, %arg8: memref<8x128xf32, #tpu.memory_space<vmem>>) attributes {dimension_semantics = [#tpu.dimension_semantics<parallel>], iteration_bounds = array<i64: 1>, scalar_prefetch = 0 : i64, scratch_operands = 0 : i64, tpu.core_type = #tpu.core_type<tc>, window_params = [{transform_indices = @transform_0, window_bounds = array<i64: 8, 8>}, {pipeline_mode = #tpu.pipeline_mode<synchronous>, transform_indices = @transform_1, window_bounds = array<i64: 128, 128>}, {pipeline_mode = #tpu.pipeline_mode<synchronous>, transform_indices = @transform_2, window_bounds = array<i64: 1, 128>}, {pipeline_mode = #tpu.pipeline_mode<synchronous>, transform_indices = @transform_3, window_bounds = array<i64: 2, 128, 128>}, {pipeline_mode = #tpu.pipeline_mode<synchronous>, transform_indices = @transform_4, window_bounds = array<i64: 2, 128>}, {pipeline_mode = #tpu.pipeline_mode<synchronous>, transform_indices = @transform_5, window_bounds = array<i64: 128, 128>}, {pipeline_mode = #tpu.pipeline_mode<synchronous>, transform_indices = @transform_6, window_bounds = array<i64: 1, 128>}, {transform_indices = @transform_7, window_bounds = array<i64: 8, 128>}]} {
    %c0 = arith.constant 0 : index
    %c0_0 = arith.constant 0 : index
    %0 = vector.load %arg1[%c0, %c0_0] : memref<8x8xi32, #tpu.memory_space<vmem>>, vector<8x8xi32>
    %1 = tpu.iota {dimensions = array<i32: 1>} : vector<8x128xi32>
    %2 = vector.extract_strided_slice %0 {offsets = [0, 0], sizes = [8, 1], strides = [1, 1]} : vector<8x8xi32> to vector<8x1xi32>
    %c0_i32 = arith.constant 0 : i32
    %3 = vector.broadcast %c0_i32 : i32 to vector<8x1xi32>
    %4 = arith.addi %2, %3 : vector<8x1xi32>
    %5 = vector.broadcast %4 : vector<8x1xi32> to vector<8x128xi32>
    %6 = arith.cmpi eq, %1, %5 : vector<8x128xi32>
    %7 = vector.extract_strided_slice %0 {offsets = [0, 1], sizes = [8, 1], strides = [1, 1]} : vector<8x8xi32> to vector<8x1xi32>
    %c4_i32 = arith.constant 4 : i32
    %8 = vector.broadcast %c4_i32 : i32 to vector<8x1xi32>
    %9 = arith.addi %7, %8 : vector<8x1xi32>
    %10 = vector.broadcast %9 : vector<8x1xi32> to vector<8x128xi32>
    %11 = arith.cmpi eq, %1, %10 : vector<8x128xi32>
    %12 = arith.ori %6, %11 : vector<8x128xi1>
    %13 = vector.extract_strided_slice %0 {offsets = [0, 2], sizes = [8, 1], strides = [1, 1]} : vector<8x8xi32> to vector<8x1xi32>
    %c8_i32 = arith.constant 8 : i32
    %14 = vector.broadcast %c8_i32 : i32 to vector<8x1xi32>
    %15 = arith.addi %13, %14 : vector<8x1xi32>
    %16 = vector.broadcast %15 : vector<8x1xi32> to vector<8x128xi32>
    %17 = arith.cmpi eq, %1, %16 : vector<8x128xi32>
    %18 = arith.ori %12, %17 : vector<8x128xi1>
    %19 = vector.extract_strided_slice %0 {offsets = [0, 3], sizes = [8, 1], strides = [1, 1]} : vector<8x8xi32> to vector<8x1xi32>
    %c12_i32 = arith.constant 12 : i32
    %20 = vector.broadcast %c12_i32 : i32 to vector<8x1xi32>
    %21 = arith.addi %19, %20 : vector<8x1xi32>
    %22 = vector.broadcast %21 : vector<8x1xi32> to vector<8x128xi32>
    %23 = arith.cmpi eq, %1, %22 : vector<8x128xi32>
    %24 = arith.ori %18, %23 : vector<8x128xi1>
    %25 = vector.extract_strided_slice %0 {offsets = [0, 4], sizes = [8, 1], strides = [1, 1]} : vector<8x8xi32> to vector<8x1xi32>
    %c16_i32 = arith.constant 16 : i32
    %26 = vector.broadcast %c16_i32 : i32 to vector<8x1xi32>
    %27 = arith.addi %25, %26 : vector<8x1xi32>
    %28 = vector.broadcast %27 : vector<8x1xi32> to vector<8x128xi32>
    %29 = arith.cmpi eq, %1, %28 : vector<8x128xi32>
    %30 = arith.ori %24, %29 : vector<8x128xi1>
    %31 = vector.extract_strided_slice %0 {offsets = [0, 5], sizes = [8, 1], strides = [1, 1]} : vector<8x8xi32> to vector<8x1xi32>
    %c20_i32 = arith.constant 20 : i32
    %32 = vector.broadcast %c20_i32 : i32 to vector<8x1xi32>
    %33 = arith.addi %31, %32 : vector<8x1xi32>
    %34 = vector.broadcast %33 : vector<8x1xi32> to vector<8x128xi32>
    %35 = arith.cmpi eq, %1, %34 : vector<8x128xi32>
    %36 = arith.ori %30, %35 : vector<8x128xi1>
    %37 = vector.extract_strided_slice %0 {offsets = [0, 6], sizes = [8, 1], strides = [1, 1]} : vector<8x8xi32> to vector<8x1xi32>
    %c24_i32 = arith.constant 24 : i32
    %38 = vector.broadcast %c24_i32 : i32 to vector<8x1xi32>
    %39 = arith.addi %37, %38 : vector<8x1xi32>
    %40 = vector.broadcast %39 : vector<8x1xi32> to vector<8x128xi32>
    %41 = arith.cmpi eq, %1, %40 : vector<8x128xi32>
    %42 = arith.ori %36, %41 : vector<8x128xi1>
    %43 = vector.extract_strided_slice %0 {offsets = [0, 7], sizes = [8, 1], strides = [1, 1]} : vector<8x8xi32> to vector<8x1xi32>
    %c28_i32 = arith.constant 28 : i32
    %44 = vector.broadcast %c28_i32 : i32 to vector<8x1xi32>
    %45 = arith.addi %43, %44 : vector<8x1xi32>
    %46 = vector.broadcast %45 : vector<8x1xi32> to vector<8x128xi32>
    %47 = arith.cmpi eq, %1, %46 : vector<8x128xi32>
    %48 = arith.ori %42, %47 : vector<8x128xi1>
    %cst = arith.constant 1.000000e+00 : f32
    %cst_1 = arith.constant 0.000000e+00 : f32
    %49 = vector.broadcast %cst : f32 to vector<8x128xf32>
    %50 = vector.broadcast %cst_1 : f32 to vector<8x128xf32>
    %51 = arith.select %48, %49, %50 : vector<8x128xi1>, vector<8x128xf32>
    %52 = arith.truncf %51 : vector<8x128xf32> to vector<8x128xbf16>
    %c0_2 = arith.constant 0 : index
    %c0_3 = arith.constant 0 : index
    %53 = vector.load %arg2[%c0_2, %c0_3] : memref<128x128xbf16, #tpu.memory_space<vmem>>, vector<128x128xbf16>
    %cst_4 = arith.constant dense<0.000000e+00> : vector<8x128xf32>
    %54 = tpu.matmul %52, %53, %cst_4 {dimension_numbers = #tpu.dot_dimension_numbers<[1], [0], [0], [1], [0, 0, 1, 1], [], []>} : vector<8x128xbf16>, vector<128x128xbf16>, vector<8x128xf32> -> vector<8x128xf32>
    %c0_5 = arith.constant 0 : index
    %c0_6 = arith.constant 0 : index
    %55 = vector.load %arg3[%c0_5, %c0_6] : memref<1x128xf32, #tpu.memory_space<vmem>>, vector<1x128xf32>
    %56 = vector.broadcast %55 : vector<1x128xf32> to vector<8x128xf32>
    %57 = arith.addf %54, %56 : vector<8x128xf32>
    %c0_7 = arith.constant 0 : index
    %c0_8 = arith.constant 0 : index
    %58 = vector.load %arg5[%c0_7, %c0_8] : memref<2x128xf32, #tpu.memory_space<vmem>>, vector<2x128xf32>
    %cst_9 = arith.constant 0.000000e+00 : f32
    %59 = vector.broadcast %cst_9 : f32 to vector<8x128xf32>
    %60 = arith.maximumf %57, %59 : vector<8x128xf32>
    %61 = arith.truncf %60 : vector<8x128xf32> to vector<8x128xbf16>
    %c0_10 = arith.constant 0 : index
    %c0_11 = arith.constant 0 : index
    %c0_12 = arith.constant 0 : index
    %62 = vector.load %arg4[%c0_10, %c0_11, %c0_12] : memref<2x128x128xbf16, #tpu.memory_space<vmem>>, vector<1x128x128xbf16>
    %63 = vector.shape_cast %62 : vector<1x128x128xbf16> to vector<128x128xbf16>
    %cst_13 = arith.constant dense<0.000000e+00> : vector<8x128xf32>
    %64 = tpu.matmul %61, %63, %cst_13 {dimension_numbers = #tpu.dot_dimension_numbers<[1], [0], [0], [1], [0, 0, 1, 1], [], []>} : vector<8x128xbf16>, vector<128x128xbf16>, vector<8x128xf32> -> vector<8x128xf32>
    %65 = vector.extract_strided_slice %58 {offsets = [0, 0], sizes = [1, 128], strides = [1, 1]} : vector<2x128xf32> to vector<1x128xf32>
    %66 = vector.broadcast %65 : vector<1x128xf32> to vector<8x128xf32>
    %67 = arith.addf %64, %66 : vector<8x128xf32>
    %cst_14 = arith.constant 0.000000e+00 : f32
    %68 = vector.broadcast %cst_14 : f32 to vector<8x128xf32>
    %69 = arith.maximumf %67, %68 : vector<8x128xf32>
    %70 = arith.truncf %69 : vector<8x128xf32> to vector<8x128xbf16>
    %c1 = arith.constant 1 : index
    %c0_15 = arith.constant 0 : index
    %c0_16 = arith.constant 0 : index
    %71 = vector.load %arg4[%c1, %c0_15, %c0_16] : memref<2x128x128xbf16, #tpu.memory_space<vmem>>, vector<1x128x128xbf16>
    %72 = vector.shape_cast %71 : vector<1x128x128xbf16> to vector<128x128xbf16>
    %cst_17 = arith.constant dense<0.000000e+00> : vector<8x128xf32>
    %73 = tpu.matmul %70, %72, %cst_17 {dimension_numbers = #tpu.dot_dimension_numbers<[1], [0], [0], [1], [0, 0, 1, 1], [], []>} : vector<8x128xbf16>, vector<128x128xbf16>, vector<8x128xf32> -> vector<8x128xf32>
    %74 = vector.extract_strided_slice %58 {offsets = [1, 0], sizes = [1, 128], strides = [1, 1]} : vector<2x128xf32> to vector<1x128xf32>
    %75 = vector.broadcast %74 : vector<1x128xf32> to vector<8x128xf32>
    %76 = arith.addf %73, %75 : vector<8x128xf32>
    %77 = arith.truncf %76 : vector<8x128xf32> to vector<8x128xbf16>
    %c0_18 = arith.constant 0 : index
    %c0_19 = arith.constant 0 : index
    %78 = vector.load %arg6[%c0_18, %c0_19] : memref<128x128xbf16, #tpu.memory_space<vmem>>, vector<128x128xbf16>
    %cst_20 = arith.constant dense<0.000000e+00> : vector<8x128xf32>
    %79 = tpu.matmul %77, %78, %cst_20 {dimension_numbers = #tpu.dot_dimension_numbers<[1], [0], [0], [1], [0, 0, 1, 1], [], []>} : vector<8x128xbf16>, vector<128x128xbf16>, vector<8x128xf32> -> vector<8x128xf32>
    %c0_21 = arith.constant 0 : index
    %c0_22 = arith.constant 0 : index
    %80 = vector.load %arg7[%c0_21, %c0_22] : memref<1x128xf32, #tpu.memory_space<vmem>>, vector<1x128xf32>
    %81 = vector.broadcast %80 : vector<1x128xf32> to vector<8x128xf32>
    %82 = arith.addf %79, %81 : vector<8x128xf32>
    %c0_23 = arith.constant 0 : index
    %c0_24 = arith.constant 0 : index
    %83 = vector.load %arg8[%c0_23, %c0_24] : memref<8x128xf32, #tpu.memory_space<vmem>>, vector<8x128xf32>
    tpu.vector_store %arg8[%c0_23, %c0_24], %82 {strides = array<i32>} : memref<8x128xf32, #tpu.memory_space<vmem>>, vector<8x128xf32>,
    return
  }
  func.func @transform_0(%arg0: i32) -> (i32, i32) {
    %c0_i32 = arith.constant 0 : i32
    %c0_i32_0 = arith.constant 0 : i32
    return %arg0, %c0_i32 : i32, i32
  }
  func.func @transform_1(%arg0: i32) -> (i32, i32) {
    %c0_i32 = arith.constant 0 : i32
    %c0_i32_0 = arith.constant 0 : i32
    %c0_i32_1 = arith.constant 0 : i32
    return %c0_i32, %c0_i32_0 : i32, i32
  }
  func.func @transform_2(%arg0: i32) -> (i32, i32) {
    %c0_i32 = arith.constant 0 : i32
    %c0_i32_0 = arith.constant 0 : i32
    %c0_i32_1 = arith.constant 0 : i32
    return %c0_i32, %c0_i32_0 : i32, i32
  }
  func.func @transform_3(%arg0: i32) -> (i32, i32, i32) {
    %c0_i32 = arith.constant 0 : i32
    %c0_i32_0 = arith.constant 0 : i32
    %c0_i32_1 = arith.constant 0 : i32
    %c0_i32_2 = arith.constant 0 : i32
    return %c0_i32, %c0_i32_0, %c0_i32_1 : i32, i32, i32
  }
  func.func @transform_4(%arg0: i32) -> (i32, i32) {
    %c0_i32 = arith.constant 0 : i32
    %c0_i32_0 = arith.constant 0 : i32
    %c0_i32_1 = arith.constant 0 : i32
    return %c0_i32, %c0_i32_0 : i32, i32
  }
  func.func @transform_5(%arg0: i32) -> (i32, i32) {
    %c0_i32 = arith.constant 0 : i32
    %c0_i32_0 = arith.constant 0 : i32
    %c0_i32_1 = arith.constant 0 : i32
    return %c0_i32, %c0_i32_0 : i32, i32
  }
  func.func @transform_6(%arg0: i32) -> (i32, i32) {
    %c0_i32 = arith.constant 0 : i32
    %c0_i32_0 = arith.constant 0 : i32
    %c0_i32_1 = arith.constant 0 : i32
    return %c0_i32, %c0_i32_0 : i32, i32
  }
  func.func @transform_7(%arg0: i32) -> (i32, i32) {
    %c0_i32 = arith.constant 0 : i32
    %c0_i32_0 = arith.constant 0 : i32
    return %arg0, %c0_i32 : i32, i32
  }
}

</mosaic_0001>

<llo_original>
// kernel: rnd_forward.1
$region0: #{rnd_forward.1}
  #allocation0 [shape = 'u32[]', space=smem, size = 0x4, offset = 0x4, fixed_abs, tag = 'smem constant byte address 0x4 - core index']
  #allocation1 [shape = 'u32[144,128]{1,0:T(1,128)}', space=vmem, size = 0x12000, scoped, tag = 'internal scratch']
  %s0 = inlined_call_operand.hbm [shape: s32[8,8], index: 0, kind: input, shape index: {}]
  %s1 = inlined_call_operand.hbm [shape: bf16[128,128], index: 1, kind: input, shape index: {}]
  %s2 = inlined_call_operand.vmem [shape: f32[1,128], index: 2, kind: input, shape index: {}]
  %s3 = inlined_call_operand.hbm [shape: bf16[2,128,128], index: 3, kind: input, shape index: {}]
  %s4 = inlined_call_operand.vmem [shape: f32[2,128], index: 4, kind: input, shape index: {}]
  %s5 = inlined_call_operand.hbm [shape: bf16[128,128], index: 5, kind: input, shape index: {}]
  %s6 = inlined_call_operand.vmem [shape: f32[1,128], index: 6, kind: input, shape index: {}]
  %s7 = inlined_call_operand.vmem [shape: f32[8,128], index: 7, kind: output, shape index: {}]
  %s8 = sld [smem:[#allocation0]]
  $region54: #{rnd_forward.1} parent=0
    _
  %s10 = ssub.s32 1, %s8
  %s11 = scalar_select 0, %s10, %s8
  $region1: #{rnd_forward.1} parent=0
    #allocation2 [shape = 'u8[4096]{0}', space=vmem, size = 0x1000, scoped, tag = 'input window, operand 0, single buffered']
    #allocation3 [shape = 's32[1]{0}', space=sflag, size = 0x4, scoped, tag = 'scoped memory for rnd_forward.1']
    #allocation4 [shape = 'u8[32768]{0}', space=vmem, size = 0x8000, scoped, tag = 'input window, operand 1, single buffered']
    #allocation5 [shape = 's32[1]{0}', space=sflag, size = 0x4, scoped, tag = 'scoped memory for rnd_forward.1']
    #allocation6 [shape = 'u8[65536]{0}', space=vmem, size = 0x10000, scoped, tag = 'input window, operand 3, single buffered']
    #allocation7 [shape = 'u8[32768]{0}', space=vmem, size = 0x8000, scoped, tag = 'input window, operand 5, single buffered']
    #allocation8 [shape = 's32[1]{0}', space=sflag, size = 0x4, scoped, tag = 'scoped memory for rnd_forward.1']
    %12 = vsyncpa [#allocation3], 0
    %13 = vsyncpa [#allocation5], 0
    %14 = vsyncpa [#allocation8], 0
    // Predicated region
    $region2: #{rnd_forward.1} parent=1 // pred_check
      _
    $region3: #{rnd_forward.1} parent=1 // pred_check_branch
      %16 = sbr.rel (0) target = $region5
    $region4: #{rnd_forward.1} parent=1 // pred_region
      %s18 = ssub.s32 128, 128
      %19 = vsyncadd [#allocation3], %s18
      %s21 = sshll.u32 [#allocation2], 4
      %s22 = int_to_ptr.vmem [resolvable:$true] %s21
      %24 = dma.hbm_to_vmem [thread:$0]  %s0, 128, %s22, [#allocation3]
    $region5: #{rnd_forward.1} parent=1 // pred_fallthru
      _
    // Predicated region
    $region6: #{rnd_forward.1} parent=1 // pred_check
      _
    $region7: #{rnd_forward.1} parent=1 // pred_check_branch
      %26 = sbr.rel (0) target = $region9
    $region8: #{rnd_forward.1} parent=1 // pred_region
      %s28 = ssub.s32 1024, 1024
      %29 = vsyncadd [#allocation5], %s28
      %s30 = sshll.u32 [#allocation4], 4
      %s31 = int_to_ptr.vmem [resolvable:$true] %s30
      %36 = dma.hbm_to_vmem [thread:$0]  %s1, 1024, %s31, [#allocation5], 64, 64, 4
    $region9: #{rnd_forward.1} parent=1 // pred_fallthru
      _
    // Predicated region
    $region10: #{rnd_forward.1} parent=1 // pred_check
      _
    $region11: #{rnd_forward.1} parent=1 // pred_check_branch
      %38 = sbr.rel (0) target = $region13
    $region12: #{rnd_forward.1} parent=1 // pred_region
      _
    $region13: #{rnd_forward.1} parent=1 // pred_fallthru
      _
    // Predicated region
    $region14: #{rnd_forward.1} parent=1 // pred_check
      _
    $region15: #{rnd_forward.1} parent=1 // pred_check_branch
      %40 = sbr.rel (0) target = $region17
    $region16: #{rnd_forward.1} parent=1 // pred_region
      %s42 = ssub.s32 2048, 2048
      %43 = vsyncadd [#allocation5], %s42
      %s44 = sshll.u32 [#allocation6], 4
      %s45 = int_to_ptr.vmem [resolvable:$true] %s44
      %50 = dma.hbm_to_vmem [thread:$0]  %s3, 2048, %s45, [#allocation5], 64, 64, 4
    $region17: #{rnd_forward.1} parent=1 // pred_fallthru
      _
    // Predicated region
    $region18: #{rnd_forward.1} parent=1 // pred_check
      _
    $region19: #{rnd_forward.1} parent=1 // pred_check_branch
      %52 = sbr.rel (0) target = $region21
    $region20: #{rnd_forward.1} parent=1 // pred_region
      _
    $region21: #{rnd_forward.1} parent=1 // pred_fallthru
      _
    // Predicated region
    $region22: #{rnd_forward.1} parent=1 // pred_check
      _
    $region23: #{rnd_forward.1} parent=1 // pred_check_branch
      %54 = sbr.rel (0) target = $region25
    $region24: #{rnd_forward.1} parent=1 // pred_region
      %s56 = ssub.s32 1024, 1024
      %57 = vsyncadd [#allocation8], %s56
      %s58 = sshll.u32 [#allocation7], 4
      %s59 = int_to_ptr.vmem [resolvable:$true] %s58
      %64 = dma.hbm_to_vmem [thread:$0]  %s5, 1024, %s59, [#allocation8], 64, 64, 4
    $region25: #{rnd_forward.1} parent=1 // pred_fallthru
      _
    // Predicated region
    $region26: #{rnd_forward.1} parent=1 // pred_check
      _
    $region27: #{rnd_forward.1} parent=1 // pred_check_branch
      %66 = sbr.rel (0) target = $region29
    $region28: #{rnd_forward.1} parent=1 // pred_region
      _
    $region29: #{rnd_forward.1} parent=1 // pred_fallthru
      _
    // Predicated region
    $region30: #{rnd_forward.1} parent=1 // pred_check
      _
    $region31: #{rnd_forward.1} parent=1 // pred_check_branch
      %68 = sbr.rel (0) target = $region33
    $region32: #{rnd_forward.1} parent=1 // pred_region
      %69 = dma.done [#allocation3], 128
    $region33: #{rnd_forward.1} parent=1 // pred_fallthru
      _
    // Predicated region
    $region34: #{rnd_forward.1} parent=1 // pred_check
      _
    $region35: #{rnd_forward.1} parent=1 // pred_check_branch
      %71 = sbr.rel (0) target = $region37
    $region36: #{rnd_forward.1} parent=1 // pred_region
      %72 = dma.done [#allocation5], 1024
    $region37: #{rnd_forward.1} parent=1 // pred_fallthru
      _
    // Predicated region
    $region38: #{rnd_forward.1} parent=1 // pred_check
      _
    $region39: #{rnd_forward.1} parent=1 // pred_check_branch
      %74 = sbr.rel (0) target = $region41
    $region40: #{rnd_forward.1} parent=1 // pred_region
      %75 = dma.done [#allocation5], 2048
    $region41: #{rnd_forward.1} parent=1 // pred_fallthru
      _
    // Predicated region
    $region42: #{rnd_forward.1} parent=1 // pred_check
      _
    $region43: #{rnd_forward.1} parent=1 // pred_check_branch
      %77 = sbr.rel (0) target = $region45
    $region44: #{rnd_forward.1} parent=1 // pred_region
      %78 = dma.done [#allocation8], 1024
    $region45: #{rnd_forward.1} parent=1 // pred_fallthru
      _
    %v80 = vld [vmem:[#allocation2] sm:$0xff]
    %v81 = vlaneseq
    %v82 = vand.u32 %v81, 127
    %83 = vset.pattern.permute.xlu0 0
    %84 = vperm.xlu0 %83, %v80
    %v85 = vpop.permute.xlu0 %84
    %vm86 = vcmp.eq.s32.totalorder %v82, %v85
    %v87 = vadd.s32 %v80, 4
    %88 = vset.pattern.permute.xlu0 1
    %89 = vperm.xlu0 %88, %v87
    %v90 = vpop.permute.xlu0 %89
    %vm91 = vcmp.eq.s32.totalorder %v82, %v90
    %vm92 = vmor %vm86, %vm91
    %v93 = vadd.s32 %v80, 8
    %94 = vset.pattern.permute.xlu0 2
    %95 = vperm.xlu0 %94, %v93
    %v96 = vpop.permute.xlu0 %95
    %vm97 = vcmp.eq.s32.totalorder %v82, %v96
    %vm98 = vmor %vm92, %vm97
    %v99 = vadd.s32 %v80, 12
    %100 = vset.pattern.permute.xlu0 3
    %101 = vperm.xlu0 %100, %v99
    %v102 = vpop.permute.xlu0 %101
    %vm103 = vcmp.eq.s32.totalorder %v82, %v102
    %vm104 = vmor %vm98, %vm103
    %v105 = vadd.s32 %v80, 16
    %106 = vset.pattern.permute.xlu0 4
    %107 = vperm.xlu0 %106, %v105
    %v108 = vpop.permute.xlu0 %107
    %vm109 = vcmp.eq.s32.totalorder %v82, %v108
    %vm110 = vmor %vm104, %vm109
    %v111 = vadd.s32 %v80, 20
    %112 = vset.pattern.permute.xlu0 5
    %113 = vperm.xlu0 %112, %v111
    %v114 = vpop.permute.xlu0 %113
    %vm115 = vcmp.eq.s32.totalorder %v82, %v114
    %vm116 = vmor %vm110, %vm115
    %v117 = vadd.s32 %v80, 24
    %118 = vset.pattern.permute.xlu0 6
    %119 = vperm.xlu0 %118, %v117
    %v120 = vpop.permute.xlu0 %119
    %vm121 = vcmp.eq.s32.totalorder %v82, %v120
    %vm122 = vmor %vm116, %vm121
    %v123 = vadd.s32 %v80, 28
    %124 = vset.pattern.permute.xlu0 7
    %125 = vperm.xlu0 %124, %v123
    %v126 = vpop.permute.xlu0 %125
    %vm127 = vcmp.eq.s32.totalorder %v82, %v126
    %vm128 = vmor %vm122, %vm127
    %v129 = vsel %vm128, 1.0, 0.0
    %v130 = vpack.c.bf16 %v129, %v129
    %v131 = vld [vmem:[#allocation4] sm:$0xf]
    %v132 = vld [vmem:[#allocation4 + $0x4] sm:$0xf]
    %v133 = vld [vmem:[#allocation4 + $0x8] sm:$0xf]
    %v134 = vld [vmem:[#allocation4 + $0xc] sm:$0xf]
    %v135 = vld [vmem:[#allocation4 + $0x10] sm:$0xf]
    %v136 = vld [vmem:[#allocation4 + $0x14] sm:$0xf]
    %v137 = vld [vmem:[#allocation4 + $0x18] sm:$0xf]
    %v138 = vld [vmem:[#allocation4 + $0x1c] sm:$0xf]
    %v139 = vld [vmem:[#allocation4 + $0x20] sm:$0xf]
    %v140 = vld [vmem:[#allocation4 + $0x24] sm:$0xf]
    %v141 = vld [vmem:[#allocation4 + $0x28] sm:$0xf]
    %v142 = vld [vmem:[#allocation4 + $0x2c] sm:$0xf]
    %v143 = vld [vmem:[#allocation4 + $0x30] sm:$0xf]
    %v144 = vld [vmem:[#allocation4 + $0x34] sm:$0xf]
    %v145 = vld [vmem:[#allocation4 + $0x38] sm:$0xf]
    %v146 = vld [vmem:[#allocation4 + $0x3c] sm:$0xf]
    %v147 = vld [vmem:[%s2] sm:$0x1]
    %v149 = vlaneseq
    %v150 = vshrl.u32 %v149, 7
    %v151 = vsub.s32 0, %v150
    %v152 = vrot.slane %v147, %v151
    %v170 = vunpack.c.l.b16 %v131
    %v171 = vunpack.c.l.b16 %v132
    %v172 = vunpack.c.l.b16 %v133
    %v173 = vunpack.c.l.b16 %v134
    %v174 = vunpack.c.l.b16 %v135
    %v175 = vunpack.c.l.b16 %v136
    %v176 = vunpack.c.l.b16 %v137
    %v177 = vunpack.c.l.b16 %v138
    %v178 = vunpack.c.l.b16 %v139
    %v179 = vunpack.c.l.b16 %v140
    %v180 = vunpack.c.l.b16 %v141
    %v181 = vunpack.c.l.b16 %v142
    %v182 = vunpack.c.l.b16 %v143
    %v183 = vunpack.c.l.b16 %v144
    %v184 = vunpack.c.l.b16 %v145
    %v185 = vunpack.c.l.b16 %v146
    %v186 = vpack.c.b16 %v171, %v170
    %v187 = vpack.c.b16 %v173, %v172
    %v188 = vpack.c.b16 %v175, %v174
    %v189 = vpack.c.b16 %v177, %v176
    %v190 = vpack.c.b16 %v179, %v178
    %v191 = vpack.c.b16 %v181, %v180
    %v192 = vpack.c.b16 %v183, %v182
    %v193 = vpack.c.b16 %v185, %v184
    %202 = vmatprep.subr.bf16.mxu0 0
    %203 = vmatpush1.bf16.msra.mxu0 %v193
    %204 = vmatprep.subr.bf16.mxu0 0
    %205 = vmatpush1.bf16.msra.mxu0 %v192
    %206 = vmatprep.subr.bf16.mxu0 0
    %207 = vmatpush1.bf16.msra.mxu0 %v191
    %208 = vmatprep.subr.bf16.mxu0 0
    %209 = vmatpush1.bf16.msra.mxu0 %v190
    %210 = vmatprep.subr.bf16.mxu0 0
    %211 = vmatpush1.bf16.msra.mxu0 %v189
    %212 = vmatprep.subr.bf16.mxu0 0
    %213 = vmatpush1.bf16.msra.mxu0 %v188
    %214 = vmatprep.subr.bf16.mxu0 0
    %215 = vmatpush1.bf16.msra.mxu0 %v187
    %216 = vmatprep.subr.bf16.mxu0 0
    %217 = vmatpush1.bf16.msra.mxu0 %v186
    %218 = vmatprep.subr.bf16.mxu0 0
    %219 = vmatpush2.bf16.msra.mxu0 0
    %220 = vmatprep.subr.bf16.mxu0 0
    %221 = vmatpush2.bf16.msra.mxu0 0
    %222 = vmatprep.subr.bf16.mxu0 0
    %223 = vmatpush2.bf16.msra.mxu0 0
    %224 = vmatprep.subr.bf16.mxu0 0
    %225 = vmatpush2.bf16.msra.mxu0 0
    %226 = vmatprep.subr.bf16.mxu0 0
    %227 = vmatpush2.bf16.msra.mxu0 0
    %228 = vmatprep.subr.bf16.mxu0 0
    %229 = vmatpush2.bf16.msra.mxu0 0
    %230 = vmatprep.subr.bf16.mxu0 0
    %231 = vmatpush2.bf16.msra.mxu0 0
    %232 = vmatprep.subr.bf16.mxu0 0
    %233 = vmatpush2.bf16.msra.mxu0 0
    %234 = vmatprep.mubr.bf16.mxu0 0
    %235 = vmatmul.mubr.bf16.gmra.mxu0 %v130
    %v236 = vpop.f32.mrf.mxu0
    %v237 = vadd.f32 %v152, %v236
    %v238 = vpop.f32.mrf.mxu0
    %v239 = vpop.f32.mrf.mxu0
    %v240 = vpop.f32.mrf.mxu0
    %241 = vdwg.mxu0
    %v242 = vld [vmem:[%s4] sm:$0x3]
    %v243 = vmax.f32 %v237, 0.0
    %v244 = vpack.c.bf16 %v243, %v243
    %v245 = vld [vmem:[#allocation6] sm:$0xf]
    %v246 = vld [vmem:[#allocation6 + $0x4] sm:$0xf]
    %v247 = vld [vmem:[#allocation6 + $0x8] sm:$0xf]
    %v248 = vld [vmem:[#allocation6 + $0xc] sm:$0xf]
    %v249 = vld [vmem:[#allocation6 + $0x10] sm:$0xf]
    %v250 = vld [vmem:[#allocation6 + $0x14] sm:$0xf]
    %v251 = vld [vmem:[#allocation6 + $0x18] sm:$0xf]
    %v252 = vld [vmem:[#allocation6 + $0x1c] sm:$0xf]
    %v253 = vld [vmem:[#allocation6 + $0x20] sm:$0xf]
    %v254 = vld [vmem:[#allocation6 + $0x24] sm:$0xf]
    %v255 = vld [vmem:[#allocation6 + $0x28] sm:$0xf]
    %v256 = vld [vmem:[#allocation6 + $0x2c] sm:$0xf]
    %v257 = vld [vmem:[#allocation6 + $0x30] sm:$0xf]
    %v258 = vld [vmem:[#allocation6 + $0x34] sm:$0xf]
    %v259 = vld [vmem:[#allocation6 + $0x38] sm:$0xf]
    %v260 = vld [vmem:[#allocation6 + $0x3c] sm:$0xf]
    %v261 = vlaneseq
    %v262 = vshrl.u32 %v261, 7
    %v263 = vsub.s32 0, %v262
    %v264 = vrot.slane %v242, %v263
    %v281 = vunpack.c.l.b16 %v245
    %v282 = vunpack.c.l.b16 %v246
    %v283 = vunpack.c.l.b16 %v247
    %v284 = vunpack.c.l.b16 %v248
    %v285 = vunpack.c.l.b16 %v249
    %v286 = vunpack.c.l.b16 %v250
    %v287 = vunpack.c.l.b16 %v251
    %v288 = vunpack.c.l.b16 %v252
    %v289 = vunpack.c.l.b16 %v253
    %v290 = vunpack.c.l.b16 %v254
    %v291 = vunpack.c.l.b16 %v255
    %v292 = vunpack.c.l.b16 %v256
    %v293 = vunpack.c.l.b16 %v257
    %v294 = vunpack.c.l.b16 %v258
    %v295 = vunpack.c.l.b16 %v259
    %v296 = vunpack.c.l.b16 %v260
    %v297 = vpack.c.b16 %v282, %v281
    %v298 = vpack.c.b16 %v284, %v283
    %v299 = vpack.c.b16 %v286, %v285
    %v300 = vpack.c.b16 %v288, %v287
    %v301 = vpack.c.b16 %v290, %v289
    %v302 = vpack.c.b16 %v292, %v291
    %v303 = vpack.c.b16 %v294, %v293
    %v304 = vpack.c.b16 %v296, %v295
    %313 = vmatprep.subr.bf16.mxu0 0
    %314 = vmatpush1.bf16.msra.mxu0 %v304
    %315 = vmatprep.subr.bf16.mxu0 0
    %316 = vmatpush1.bf16.msra.mxu0 %v303
    %317 = vmatprep.subr.bf16.mxu0 0
    %318 = vmatpush1.bf16.msra.mxu0 %v302
    %319 = vmatprep.subr.bf16.mxu0 0
    %320 = vmatpush1.bf16.msra.mxu0 %v301
    %321 = vmatprep.subr.bf16.mxu0 0
    %322 = vmatpush1.bf16.msra.mxu0 %v300
    %323 = vmatprep.subr.bf16.mxu0 0
    %324 = vmatpush1.bf16.msra.mxu0 %v299
    %325 = vmatprep.subr.bf16.mxu0 0
    %326 = vmatpush1.bf16.msra.mxu0 %v298
    %327 = vmatprep.subr.bf16.mxu0 0
    %328 = vmatpush1.bf16.msra.mxu0 %v297
    %329 = vmatprep.subr.bf16.mxu0 0
    %330 = vmatpush2.bf16.msra.mxu0 0
    %331 = vmatprep.subr.bf16.mxu0 0
    %332 = vmatpush2.bf16.msra.mxu0 0
    %333 = vmatprep.subr.bf16.mxu0 0
    %334 = vmatpush2.bf16.msra.mxu0 0
    %335 = vmatprep.subr.bf16.mxu0 0
    %336 = vmatpush2.bf16.msra.mxu0 0
    %337 = vmatprep.subr.bf16.mxu0 0
    %338 = vmatpush2.bf16.msra.mxu0 0
    %339 = vmatprep.subr.bf16.mxu0 0
    %340 = vmatpush2.bf16.msra.mxu0 0
    %341 = vmatprep.subr.bf16.mxu0 0
    %342 = vmatpush2.bf16.msra.mxu0 0
    %343 = vmatprep.subr.bf16.mxu0 0
    %344 = vmatpush2.bf16.msra.mxu0 0
    %345 = vmatprep.mubr.bf16.mxu0 0
    %346 = vmatmul.mubr.bf16.gmra.mxu0 %v244
    %v347 = vpop.f32.mrf.mxu0
    %v348 = vadd.f32 %v264, %v347
    %v349 = vpop.f32.mrf.mxu0
    %v350 = vpop.f32.mrf.mxu0
    %v351 = vpop.f32.mrf.mxu0
    %352 = vdwg.mxu0
    %v353 = vmax.f32 %v348, 0.0
    %v354 = vpack.c.bf16 %v353, %v353
    %s355 = scalar_lea.vmem [#allocation6], 64
    %v356 = vld [vmem:[%s355] sm:$0xf]
    %v357 = vld [vmem:[%s355 + $0x4] sm:$0xf]
    %v358 = vld [vmem:[%s355 + $0x8] sm:$0xf]
    %v359 = vld [vmem:[%s355 + $0xc] sm:$0xf]
    %v360 = vld [vmem:[%s355 + $0x10] sm:$0xf]
    %v361 = vld [vmem:[%s355 + $0x14] sm:$0xf]
    %v362 = vld [vmem:[%s355 + $0x18] sm:$0xf]
    %v363 = vld [vmem:[%s355 + $0x1c] sm:$0xf]
    %v364 = vld [vmem:[%s355 + $0x20] sm:$0xf]
    %v365 = vld [vmem:[%s355 + $0x24] sm:$0xf]
    %v366 = vld [vmem:[%s355 + $0x28] sm:$0xf]
    %v367 = vld [vmem:[%s355 + $0x2c] sm:$0xf]
    %v368 = vld [vmem:[%s355 + $0x30] sm:$0xf]
    %v369 = vld [vmem:[%s355 + $0x34] sm:$0xf]
    %v370 = vld [vmem:[%s355 + $0x38] sm:$0xf]
    %v371 = vld [vmem:[%s355 + $0x3c] sm:$0xf]
    %v372 = vlaneseq
    %v373 = vshrl.u32 %v372, 7
    %v374 = vsub.s32 1, %v373
    %v375 = vrot.slane %v242, %v374
    %v392 = vunpack.c.l.b16 %v356
    %v393 = vunpack.c.l.b16 %v357
    %v394 = vunpack.c.l.b16 %v358
    %v395 = vunpack.c.l.b16 %v359
    %v396 = vunpack.c.l.b16 %v360
    %v397 = vunpack.c.l.b16 %v361
    %v398 = vunpack.c.l.b16 %v362
    %v399 = vunpack.c.l.b16 %v363
    %v400 = vunpack.c.l.b16 %v364
    %v401 = vunpack.c.l.b16 %v365
    %v402 = vunpack.c.l.b16 %v366
    %v403 = vunpack.c.l.b16 %v367
    %v404 = vunpack.c.l.b16 %v368
    %v405 = vunpack.c.l.b16 %v369
    %v406 = vunpack.c.l.b16 %v370
    %v407 = vunpack.c.l.b16 %v371
    %v408 = vpack.c.b16 %v393, %v392
    %v409 = vpack.c.b16 %v395, %v394
    %v410 = vpack.c.b16 %v397, %v396
    %v411 = vpack.c.b16 %v399, %v398
    %v412 = vpack.c.b16 %v401, %v400
    %v413 = vpack.c.b16 %v403, %v402
    %v414 = vpack.c.b16 %v405, %v404
    %v415 = vpack.c.b16 %v407, %v406
    %424 = vmatprep.subr.bf16.mxu0 0
    %425 = vmatpush1.bf16.msra.mxu0 %v415
    %426 = vmatprep.subr.bf16.mxu0 0
    %427 = vmatpush1.bf16.msra.mxu0 %v414
    %428 = vmatprep.subr.bf16.mxu0 0
    %429 = vmatpush1.bf16.msra.mxu0 %v413
    %430 = vmatprep.subr.bf16.mxu0 0
    %431 = vmatpush1.bf16.msra.mxu0 %v412
    %432 = vmatprep.subr.bf16.mxu0 0
    %433 = vmatpush1.bf16.msra.mxu0 %v411
    %434 = vmatprep.subr.bf16.mxu0 0
    %435 = vmatpush1.bf16.msra.mxu0 %v410
    %436 = vmatprep.subr.bf16.mxu0 0
    %437 = vmatpush1.bf16.msra.mxu0 %v409
    %438 = vmatprep.subr.bf16.mxu0 0
    %439 = vmatpush1.bf16.msra.mxu0 %v408
    %440 = vmatprep.subr.bf16.mxu0 0
    %441 = vmatpush2.bf16.msra.mxu0 0
    %442 = vmatprep.subr.bf16.mxu0 0
    %443 = vmatpush2.bf16.msra.mxu0 0
    %444 = vmatprep.subr.bf16.mxu0 0
    %445 = vmatpush2.bf16.msra.mxu0 0
    %446 = vmatprep.subr.bf16.mxu0 0
    %447 = vmatpush2.bf16.msra.mxu0 0
    %448 = vmatprep.subr.bf16.mxu0 0
    %449 = vmatpush2.bf16.msra.mxu0 0
    %450 = vmatprep.subr.bf16.mxu0 0
    %451 = vmatpush2.bf16.msra.mxu0 0
    %452 = vmatprep.subr.bf16.mxu0 0
    %453 = vmatpush2.bf16.msra.mxu0 0
    %454 = vmatprep.subr.bf16.mxu0 0
    %455 = vmatpush2.bf16.msra.mxu0 0
    %456 = vmatprep.mubr.bf16.mxu0 0
    %457 = vmatmul.mubr.bf16.gmra.mxu0 %v354
    %v458 = vpop.f32.mrf.mxu0
    %v459 = vadd.f32 %v375, %v458
    %v460 = vpop.f32.mrf.mxu0
    %v461 = vpop.f32.mrf.mxu0
    %v462 = vpop.f32.mrf.mxu0
    %463 = vdwg.mxu0
    %v464 = vpack.c.bf16 %v459, %v459
    %v465 = vld [vmem:[#allocation7] sm:$0xf]
    %v466 = vld [vmem:[#allocation7 + $0x4] sm:$0xf]
    %v467 = vld [vmem:[#allocation7 + $0x8] sm:$0xf]
    %v468 = vld [vmem:[#allocation7 + $0xc] sm:$0xf]
    %v469 = vld [vmem:[#allocation7 + $0x10] sm:$0xf]
    %v470 = vld [vmem:[#allocation7 + $0x14] sm:$0xf]
    %v471 = vld [vmem:[#allocation7 + $0x18] sm:$0xf]
    %v472 = vld [vmem:[#allocation7 + $0x1c] sm:$0xf]
    %v473 = vld [vmem:[#allocation7 + $0x20] sm:$0xf]
    %v474 = vld [vmem:[#allocation7 + $0x24] sm:$0xf]
    %v475 = vld [vmem:[#allocation7 + $0x28] sm:$0xf]
    %v476 = vld [vmem:[#allocation7 + $0x2c] sm:$0xf]
    %v477 = vld [vmem:[#allocation7 + $0x30] sm:$0xf]
    %v478 = vld [vmem:[#allocation7 + $0x34] sm:$0xf]
    %v479 = vld [vmem:[#allocation7 + $0x38] sm:$0xf]
    %v480 = vld [vmem:[#allocation7 + $0x3c] sm:$0xf]
    %v481 = vld [vmem:[%s6] sm:$0x1]
    %v483 = vlaneseq
    %v484 = vshrl.u32 %v483, 7
    %v485 = vsub.s32 0, %v484
    %v486 = vrot.slane %v481, %v485
    %v504 = vunpack.c.l.b16 %v465
    %v505 = vunpack.c.l.b16 %v466
    %v506 = vunpack.c.l.b16 %v467
    %v507 = vunpack.c.l.b16 %v468
    %v508 = vunpack.c.l.b16 %v469
    %v509 = vunpack.c.l.b16 %v470
    %v510 = vunpack.c.l.b16 %v471
    %v511 = vunpack.c.l.b16 %v472
    %v512 = vunpack.c.l.b16 %v473
    %v513 = vunpack.c.l.b16 %v474
    %v514 = vunpack.c.l.b16 %v475
    %v515 = vunpack.c.l.b16 %v476
    %v516 = vunpack.c.l.b16 %v477
    %v517 = vunpack.c.l.b16 %v478
    %v518 = vunpack.c.l.b16 %v479
    %v519 = vunpack.c.l.b16 %v480
    %v520 = vpack.c.b16 %v505, %v504
    %v521 = vpack.c.b16 %v507, %v506
    %v522 = vpack.c.b16 %v509, %v508
    %v523 = vpack.c.b16 %v511, %v510
    %v524 = vpack.c.b16 %v513, %v512
    %v525 = vpack.c.b16 %v515, %v514
    %v526 = vpack.c.b16 %v517, %v516
    %v527 = vpack.c.b16 %v519, %v518
    %536 = vmatprep.subr.bf16.mxu0 0
    %537 = vmatpush1.bf16.msra.mxu0 %v527
    %538 = vmatprep.subr.bf16.mxu0 0
    %539 = vmatpush1.bf16.msra.mxu0 %v526
    %540 = vmatprep.subr.bf16.mxu0 0
    %541 = vmatpush1.bf16.msra.mxu0 %v525
    %542 = vmatprep.subr.bf16.mxu0 0
    %543 = vmatpush1.bf16.msra.mxu0 %v524
    %544 = vmatprep.subr.bf16.mxu0 0
    %545 = vmatpush1.bf16.msra.mxu0 %v523
    %546 = vmatprep.subr.bf16.mxu0 0
    %547 = vmatpush1.bf16.msra.mxu0 %v522
    %548 = vmatprep.subr.bf16.mxu0 0
    %549 = vmatpush1.bf16.msra.mxu0 %v521
    %550 = vmatprep.subr.bf16.mxu0 0
    %551 = vmatpush1.bf16.msra.mxu0 %v520
    %552 = vmatprep.subr.bf16.mxu0 0
    %553 = vmatpush2.bf16.msra.mxu0 0
    %554 = vmatprep.subr.bf16.mxu0 0
    %555 = vmatpush2.bf16.msra.mxu0 0
    %556 = vmatprep.subr.bf16.mxu0 0
    %557 = vmatpush2.bf16.msra.mxu0 0
    %558 = vmatprep.subr.bf16.mxu0 0
    %559 = vmatpush2.bf16.msra.mxu0 0
    %560 = vmatprep.subr.bf16.mxu0 0
    %561 = vmatpush2.bf16.msra.mxu0 0
    %562 = vmatprep.subr.bf16.mxu0 0
    %563 = vmatpush2.bf16.msra.mxu0 0
    %564 = vmatprep.subr.bf16.mxu0 0
    %565 = vmatpush2.bf16.msra.mxu0 0
    %566 = vmatprep.subr.bf16.mxu0 0
    %567 = vmatpush2.bf16.msra.mxu0 0
    %568 = vmatprep.mubr.bf16.mxu0 0
    %569 = vmatmul.mubr.bf16.gmra.mxu0 %v464
    %v570 = vpop.f32.mrf.mxu0
    %v571 = vadd.f32 %v486, %v570
    %v572 = vpop.f32.mrf.mxu0
    %v573 = vpop.f32.mrf.mxu0
    %v574 = vpop.f32.mrf.mxu0
    %575 = vdwg.mxu0
    %576 = vst [vmem:[%s7] sm:$0xff] %v571
    // Predicated region
    $region46: #{rnd_forward.1} parent=1 // pred_check
      _
    $region47: #{rnd_forward.1} parent=1 // pred_check_branch
      %578 = sbr.rel (0) target = $region49
    $region48: #{rnd_forward.1} parent=1 // pred_region
      _
    $region49: #{rnd_forward.1} parent=1 // pred_fallthru
      _
    // Predicated region
    $region50: #{rnd_forward.1} parent=1 // pred_check
      _
    $region51: #{rnd_forward.1} parent=1 // pred_check_branch
      %580 = sbr.rel (0) target = $region53
    $region52: #{rnd_forward.1} parent=1 // pred_region
      _
    $region53: #{rnd_forward.1} parent=1 // pred_fallthru
      _
    %581 = vsyncpa [#allocation3], 1
    %582 = vsyncpa [#allocation5], 1
    %583 = vsyncpa [#allocation8], 1

// kernel: rnd_forward.1
$region0: #{rnd_forward.1}
  #allocation0 [shape = 'u32[]', space=smem, size = 0x4, offset = 0x4, fixed_abs, tag = 'smem constant byte address 0x4 - core index']
  #allocation1 [shape = 'u32[144,128]{1,0:T(1,128)}', space=vmem, size = 0x12000, scoped, tag = 'internal scratch']
  %s0 = inlined_call_operand.hbm [shape: s32[8,8], index: 0, kind: input, shape index: {}]
  %s1 = inlined_call_operand.hbm [shape: bf16[128,128], index: 1, kind: input, shape index: {}]
  %s2 = inlined_call_operand.vmem [shape: f32[1,128], index: 2, kind: input, shape index: {}]
  %s3 = inlined_call_operand.hbm [shape: bf16[2,128,128], index: 3, kind: input, shape index: {}]
  %s4 = inlined_call_operand.vmem [shape: f32[2,128], index: 4, kind: input, shape index: {}]
  %s5 = inlined_call_operand.hbm [shape: bf16[128,128], index: 5, kind: input, shape index: {}]
  %s6 = inlined_call_operand.vmem [shape: f32[1,128], index: 6, kind: input, shape index: {}]
  %s7 = inlined_call_operand.vmem [shape: f32[8,128], index: 7, kind: output, shape index: {}]
  %s8 = sld [smem:[#allocation0]]
  $region54: #{rnd_forward.1} parent=0
    _
  %s10 = ssub.s32 1, %s8
  %s11 = scalar_select 0, %s10, %s8
  $region1: #{rnd_forward.1} parent=0
    #allocation2 [shape = 'u8[4096]{0}', space=vmem, size = 0x1000, scoped, tag = 'input window, operand 0, single buffered']
    #allocation3 [shape = 's32[1]{0}', space=sflag, size = 0x4, scoped, tag = 'scoped memory for rnd_forward.1']
    #allocation4 [shape = 'u8[32768]{0}', space=vmem, size = 0x8000, scoped, tag = 'input window, operand 1, single buffered']
    #allocation5 [shape = 's32[1]{0}', space=sflag, size = 0x4, scoped, tag = 'scoped memory for rnd_forward.1']
    #allocation6 [shape = 'u8[65536]{0}', space=vmem, size = 0x10000, scoped, tag = 'input window, operand 3, single buffered']
    #allocation7 [shape = 'u8[32768]{0}', space=vmem, size = 0x8000, scoped, tag = 'input window, operand 5, single buffered']
    #allocation8 [shape = 's32[1]{0}', space=sflag, size = 0x4, scoped, tag = 'scoped memory for rnd_forward.1']
    %12 = vsyncpa [#allocation3], 0
    %13 = vsyncpa [#allocation5], 0
    %14 = vsyncpa [#allocation8], 0
    // Predicated region
    $region2: #{rnd_forward.1} parent=1 // pred_check
      _
    $region3: #{rnd_forward.1} parent=1 // pred_check_branch
      %16 = sbr.rel (0) target = $region5
    $region4: #{rnd_forward.1} parent=1 // pred_region
      %s18 = ssub.s32 128, 128
      %19 = vsyncadd [#allocation3], %s18
      %s21 = sshll.u32 [#allocation2], 4
      %s22 = int_to_ptr.vmem [resolvable:$true] %s21
      %24 = dma.hbm_to_vmem [thread:$0]  %s0, 128, %s22, [#allocation3]
    $region5: #{rnd_forward.1} parent=1 // pred_fallthru
      _
    // Predicated region
    $region6: #{rnd_forward.1} parent=1 // pred_check
      _
    $region7: #{rnd_forward.1} parent=1 // pred_check_branch
      %26 = sbr.rel (0) target = $region9
    $region8: #{rnd_forward.1} parent=1 // pred_region
      %s28 = ssub.s32 1024, 1024
      %29 = vsyncadd [#allocation5], %s28
      %s30 = sshll.u32 [#allocation4], 4
      %s31 = int_to_ptr.vmem [resolvable:$true] %s30
      %36 = dma.hbm_to_vmem [thread:$0]  %s1, 1024, %s31, [#allocation5], 64, 64, 4
    $region9: #{rnd_forward.1} parent=1 // pred_fallthru
      _
    // Predicated region
    $region10: #{rnd_forward.1} parent=1 // pred_check
      _
    $region11: #{rnd_forward.1} parent=1 // pred_check_branch
      %38 = sbr.rel (0) target = $region13
    $region12: #{rnd_forward.1} parent=1 // pred_region
      _
    $region13: #{rnd_forward.1} parent=1 // pred_fallthru
      _
    // Predicated region
    $region14: #{rnd_forward.1} parent=1 // pred_check
      _
    $region15: #{rnd_forward.1} parent=1 // pred_check_branch
      %40 = sbr.rel (0) target = $region17
    $region16: #{rnd_forward.1} parent=1 // pred_region
      %s42 = ssub.s32 2048, 2048
      %43 = vsyncadd [#allocation5], %s42
      %s44 = sshll.u32 [#allocation6], 4
      %s45 = int_to_ptr.vmem [resolvable:$true] %s44
      %50 = dma.hbm_to_vmem [thread:$0]  %s3, 2048, %s45, [#allocation5], 64, 64, 4
    $region17: #{rnd_forward.1} parent=1 // pred_fallthru
      _
    // Predicated region
    $region18: #{rnd_forward.1} parent=1 // pred_check
      _
    $region19: #{rnd_forward.1} parent=1 // pred_check_branch
      %52 = sbr.rel (0) target = $region21
    $region20: #{rnd_forward.1} parent=1 // pred_region
      _
    $region21: #{rnd_forward.1} parent=1 // pred_fallthru
      _
    // Predicated region
    $region22: #{rnd_forward.1} parent=1 // pred_check
      _
    $region23: #{rnd_forward.1} parent=1 // pred_check_branch
      %54 = sbr.rel (0) target = $region25
    $region24: #{rnd_forward.1} parent=1 // pred_region
      %s56 = ssub.s32 1024, 1024
      %57 = vsyncadd [#allocation8], %s56
      %s58 = sshll.u32 [#allocation7], 4
      %s59 = int_to_ptr.vmem [resolvable:$true] %s58
      %64 = dma.hbm_to_vmem [thread:$0]  %s5, 1024, %s59, [#allocation8], 64, 64, 4
    $region25: #{rnd_forward.1} parent=1 // pred_fallthru
      _
    // Predicated region
    $region26: #{rnd_forward.1} parent=1 // pred_check
      _
    $region27: #{rnd_forward.1} parent=1 // pred_check_branch
      %66 = sbr.rel (0) target = $region29
    $region28: #{rnd_forward.1} parent=1 // pred_region
      _
    $region29: #{rnd_forward.1} parent=1 // pred_fallthru
      _
    // Predicated region
    $region30: #{rnd_forward.1} parent=1 // pred_check
      _
    $region31: #{rnd_forward.1} parent=1 // pred_check_branch
      %68 = sbr.rel (0) target = $region33
    $region32: #{rnd_forward.1} parent=1 // pred_region
      %69 = dma.done [#allocation3], 128
    $region33: #{rnd_forward.1} parent=1 // pred_fallthru
      _
    // Predicated region
    $region34: #{rnd_forward.1} parent=1 // pred_check
      _
    $region35: #{rnd_forward.1} parent=1 // pred_check_branch
      %71 = sbr.rel (0) target = $region37
    $region36: #{rnd_forward.1} parent=1 // pred_region
      %72 = dma.done [#allocation5], 1024
    $region37: #{rnd_forward.1} parent=1 // pred_fallthru
      _
    // Predicated region
    $region38: #{rnd_forward.1} parent=1 // pred_check
      _
    $region39: #{rnd_forward.1} parent=1 // pred_check_branch
      %74 = sbr.rel (0) target = $region41
    $region40: #{rnd_forward.1} parent=1 // pred_region
      %75 = dma.done [#allocation5], 2048
    $region41: #{rnd_forward.1} parent=1 // pred_fallthru
      _
    // Predicated region
    $region42: #{rnd_forward.1} parent=1 // pred_check
      _
    $region43: #{rnd_forward.1} parent=1 // pred_check_branch
      %77 = sbr.rel (0) target = $region45
    $region44: #{rnd_forward.1} parent=1 // pred_region
      %78 = dma.done [#allocation8], 1024
    $region45: #{rnd_forward.1} parent=1 // pred_fallthru
      _
    %v80 = vld [vmem:[#allocation2] sm:$0xff]
    %v81 = vlaneseq
    %v82 = vand.u32 %v81, 127
    %83 = vset.pattern.permute.xlu0 0
    %84 = vperm.xlu0 %83, %v80
    %v85 = vpop.permute.xlu0 %84
    %vm86 = vcmp.eq.s32.totalorder %v82, %v85
    %v87 = vadd.s32 %v80, 4
    %88 = vset.pattern.permute.xlu0 1
    %89 = vperm.xlu0 %88, %v87
    %v90 = vpop.permute.xlu0 %89
    %vm91 = vcmp.eq.s32.totalorder %v82, %v90
    %vm92 = vmor %vm86, %vm91
    %v93 = vadd.s32 %v80, 8
    %94 = vset.pattern.permute.xlu0 2
    %95 = vperm.xlu0 %94, %v93
    %v96 = vpop.permute.xlu0 %95
    %vm97 = vcmp.eq.s32.totalorder %v82, %v96
    %vm98 = vmor %vm92, %vm97
    %v99 = vadd.s32 %v80, 12
    %100 = vset.pattern.permute.xlu0 3
    %101 = vperm.xlu0 %100, %v99
    %v102 = vpop.permute.xlu0 %101
    %vm103 = vcmp.eq.s32.totalorder %v82, %v102
    %vm104 = vmor %vm98, %vm103
    %v105 = vadd.s32 %v80, 16
    %106 = vset.pattern.permute.xlu0 4
    %107 = vperm.xlu0 %106, %v105
    %v108 = vpop.permute.xlu0 %107
    %vm109 = vcmp.eq.s32.totalorder %v82, %v108
    %vm110 = vmor %vm104, %vm109
    %v111 = vadd.s32 %v80, 20
    %112 = vset.pattern.permute.xlu0 5
    %113 = vperm.xlu0 %112, %v111
    %v114 = vpop.permute.xlu0 %113
    %vm115 = vcmp.eq.s32.totalorder %v82, %v114
    %vm116 = vmor %vm110, %vm115
    %v117 = vadd.s32 %v80, 24
    %118 = vset.pattern.permute.xlu0 6
    %119 = vperm.xlu0 %118, %v117
    %v120 = vpop.permute.xlu0 %119
    %vm121 = vcmp.eq.s32.totalorder %v82, %v120
    %vm122 = vmor %vm116, %vm121
    %v123 = vadd.s32 %v80, 28
    %124 = vset.pattern.permute.xlu0 7
    %125 = vperm.xlu0 %124, %v123
    %v126 = vpop.permute.xlu0 %125
    %vm127 = vcmp.eq.s32.totalorder %v82, %v126
    %vm128 = vmor %vm122, %vm127
    %v129 = vsel %vm128, 1.0, 0.0
    %v130 = vpack.c.bf16 %v129, %v129
    %v131 = vld [vmem:[#allocation4] sm:$0xf]
    %v132 = vld [vmem:[#allocation4 + $0x4] sm:$0xf]
    %v133 = vld [vmem:[#allocation4 + $0x8] sm:$0xf]
    %v134 = vld [vmem:[#allocation4 + $0xc] sm:$0xf]
    %v135 = vld [vmem:[#allocation4 + $0x10] sm:$0xf]
    %v136 = vld [vmem:[#allocation4 + $0x14] sm:$0xf]
    %v137 = vld [vmem:[#allocation4 + $0x18] sm:$0xf]
    %v138 = vld [vmem:[#allocation4 + $0x1c] sm:$0xf]
    %v139 = vld [vmem:[#allocation4 + $0x20] sm:$0xf]
    %v140 = vld [vmem:[#allocation4 + $0x24] sm:$0xf]
    %v141 = vld [vmem:[#allocation4 + $0x28] sm:$0xf]
    %v142 = vld [vmem:[#allocation4 + $0x2c] sm:$0xf]
    %v143 = vld [vmem:[#allocation4 + $0x30] sm:$0xf]
    %v144 = vld [vmem:[#allocation4 + $0x34] sm:$0xf]
    %v145 = vld [vmem:[#allocation4 + $0x38] sm:$0xf]
    %v146 = vld [vmem:[#allocation4 + $0x3c] sm:$0xf]
    %v147 = vld [vmem:[%s2] sm:$0x1]
    %v149 = vlaneseq
    %v150 = vshrl.u32 %v149, 7
    %v151 = vsub.s32 0, %v150
    %v152 = vrot.slane %v147, %v151
    %v170 = vunpack.c.l.b16 %v131
    %v171 = vunpack.c.l.b16 %v132
    %v172 = vunpack.c.l.b16 %v133
    %v173 = vunpack.c.l.b16 %v134
    %v174 = vunpack.c.l.b16 %v135
    %v175 = vunpack.c.l.b16 %v136
    %v176 = vunpack.c.l.b16 %v137
    %v177 = vunpack.c.l.b16 %v138
    %v178 = vunpack.c.l.b16 %v139
    %v179 = vunpack.c.l.b16 %v140
    %v180 = vunpack.c.l.b16 %v141
    %v181 = vunpack.c.l.b16 %v142
    %v182 = vunpack.c.l.b16 %v143
    %v183 = vunpack.c.l.b16 %v144
    %v184 = vunpack.c.l.b16 %v145
    %v185 = vunpack.c.l.b16 %v146
    %v186 = vpack.c.b16 %v171, %v170
    %v187 = vpack.c.b16 %v173, %v172
    %v188 = vpack.c.b16 %v175, %v174
    %v189 = vpack.c.b16 %v177, %v176
    %v190 = vpack.c.b16 %v179, %v178
    %v191 = vpack.c.b16 %v181, %v180
    %v192 = vpack.c.b16 %v183, %v182
    %v193 = vpack.c.b16 %v185, %v184
    %202 = vmatprep.subr.bf16.mxu0 0
    %203 = vmatpush1.bf16.msra.mxu0 %v193
    %204 = vmatprep.subr.bf16.mxu0 0
    %205 = vmatpush1.bf16.msra.mxu0 %v192
    %206 = vmatprep.subr.bf16.mxu0 0
    %207 = vmatpush1.bf16.msra.mxu0 %v191
    %208 = vmatprep.subr.bf16.mxu0 0
    %209 = vmatpush1.bf16.msra.mxu0 %v190
    %210 = vmatprep.subr.bf16.mxu0 0
    %211 = vmatpush1.bf16.msra.mxu0 %v189
    %212 = vmatprep.subr.bf16.mxu0 0
    %213 = vmatpush1.bf16.msra.mxu0 %v188
    %214 = vmatprep.subr.bf16.mxu0 0
    %215 = vmatpush1.bf16.msra.mxu0 %v187
    %216 = vmatprep.subr.bf16.mxu0 0
    %217 = vmatpush1.bf16.msra.mxu0 %v186
    %218 = vmatprep.subr.bf16.mxu0 0
    %219 = vmatpush2.bf16.msra.mxu0 0
    %220 = vmatprep.subr.bf16.mxu0 0
    %221 = vmatpush2.bf16.msra.mxu0 0
    %222 = vmatprep.subr.bf16.mxu0 0
    %223 = vmatpush2.bf16.msra.mxu0 0
    %224 = vmatprep.subr.bf16.mxu0 0
    %225 = vmatpush2.bf16.msra.mxu0 0
    %226 = vmatprep.subr.bf16.mxu0 0
    %227 = vmatpush2.bf16.msra.mxu0 0
    %228 = vmatprep.subr.bf16.mxu0 0
    %229 = vmatpush2.bf16.msra.mxu0 0
    %230 = vmatprep.subr.bf16.mxu0 0
    %231 = vmatpush2.bf16.msra.mxu0 0
    %232 = vmatprep.subr.bf16.mxu0 0
    %233 = vmatpush2.bf16.msra.mxu0 0
    %234 = vmatprep.mubr.bf16.mxu0 0
    %235 = vmatmul.mubr.bf16.gmra.mxu0 %v130
    %v236 = vpop.f32.mrf.mxu0
    %v237 = vadd.f32 %v152, %v236
    %v238 = vpop.f32.mrf.mxu0
    %v239 = vpop.f32.mrf.mxu0
    %v240 = vpop.f32.mrf.mxu0
    %241 = vdwg.mxu0
    %v242 = vld [vmem:[%s4] sm:$0x3]
    %v243 = vmax.f32 %v237, 0.0
    %v244 = vpack.c.bf16 %v243, %v243
    %v245 = vld [vmem:[#allocation6] sm:$0xf]
    %v246 = vld [vmem:[#allocation6 + $0x4] sm:$0xf]
    %v247 = vld [vmem:[#allocation6 + $0x8] sm:$0xf]
    %v248 = vld [vmem:[#allocation6 + $0xc] sm:$0xf]
    %v249 = vld [vmem:[#allocation6 + $0x10] sm:$0xf]
    %v250 = vld [vmem:[#allocation6 + $0x14] sm:$0xf]
    %v251 = vld [vmem:[#allocation6 + $0x18] sm:$0xf]
    %v252 = vld [vmem:[#allocation6 + $0x1c] sm:$0xf]
    %v253 = vld [vmem:[#allocation6 + $0x20] sm:$0xf]
    %v254 = vld [vmem:[#allocation6 + $0x24] sm:$0xf]
    %v255 = vld [vmem:[#allocation6 + $0x28] sm:$0xf]
    %v256 = vld [vmem:[#allocation6 + $0x2c] sm:$0xf]
    %v257 = vld [vmem:[#allocation6 + $0x30] sm:$0xf]
    %v258 = vld [vmem:[#allocation6 + $0x34] sm:$0xf]
    %v259 = vld [vmem:[#allocation6 + $0x38] sm:$0xf]
    %v260 = vld [vmem:[#allocation6 + $0x3c] sm:$0xf]
    %v261 = vlaneseq
    %v262 = vshrl.u32 %v261, 7
    %v263 = vsub.s32 0, %v262
    %v264 = vrot.slane %v242, %v263
    %v281 = vunpack.c.l.b16 %v245
    %v282 = vunpack.c.l.b16 %v246
    %v283 = vunpack.c.l.b16 %v247
    %v284 = vunpack.c.l.b16 %v248
    %v285 = vunpack.c.l.b16 %v249
    %v286 = vunpack.c.l.b16 %v250
    %v287 = vunpack.c.l.b16 %v251
    %v288 = vunpack.c.l.b16 %v252
    %v289 = vunpack.c.l.b16 %v253
    %v290 = vunpack.c.l.b16 %v254
    %v291 = vunpack.c.l.b16 %v255
    %v292 = vunpack.c.l.b16 %v256
    %v293 = vunpack.c.l.b16 %v257
    %v294 = vunpack.c.l.b16 %v258
    %v295 = vunpack.c.l.b16 %v259
    %v296 = vunpack.c.l.b16 %v260
    %v297 = vpack.c.b16 %v282, %v281
    %v298 = vpack.c.b16 %v284, %v283
    %v299 = vpack.c.b16 %v286, %v285
    %v300 = vpack.c.b16 %v288, %v287
    %v301 = vpack.c.b16 %v290, %v289
    %v302 = vpack.c.b16 %v292, %v291
    %v303 = vpack.c.b16 %v294, %v293
    %v304 = vpack.c.b16 %v296, %v295
    %313 = vmatprep.subr.bf16.mxu0 0
    %314 = vmatpush1.bf16.msra.mxu0 %v304
    %315 = vmatprep.subr.bf16.mxu0 0
    %316 = vmatpush1.bf16.msra.mxu0 %v303
    %317 = vmatprep.subr.bf16.mxu0 0
    %318 = vmatpush1.bf16.msra.mxu0 %v302
    %319 = vmatprep.subr.bf16.mxu0 0
    %320 = vmatpush1.bf16.msra.mxu0 %v301
    %321 = vmatprep.subr.bf16.mxu0 0
    %322 = vmatpush1.bf16.msra.mxu0 %v300
    %323 = vmatprep.subr.bf16.mxu0 0
    %324 = vmatpush1.bf16.msra.mxu0 %v299
    %325 = vmatprep.subr.bf16.mxu0 0
    %326 = vmatpush1.bf16.msra.mxu0 %v298
    %327 = vmatprep.subr.bf16.mxu0 0
    %328 = vmatpush1.bf16.msra.mxu0 %v297
    %329 = vmatprep.subr.bf16.mxu0 0
    %330 = vmatpush2.bf16.msra.mxu0 0
    %331 = vmatprep.subr.bf16.mxu0 0
    %332 = vmatpush2.bf16.msra.mxu0 0
    %333 = vmatprep.subr.bf16.mxu0 0
    %334 = vmatpush2.bf16.msra.mxu0 0
    %335 = vmatprep.subr.bf16.mxu0 0
    %336 = vmatpush2.bf16.msra.mxu0 0
    %337 = vmatprep.subr.bf16.mxu0 0
    %338 = vmatpush2.bf16.msra.mxu0 0
    %339 = vmatprep.subr.bf16.mxu0 0
    %340 = vmatpush2.bf16.msra.mxu0 0
    %341 = vmatprep.subr.bf16.mxu0 0
    %342 = vmatpush2.bf16.msra.mxu0 0
    %343 = vmatprep.subr.bf16.mxu0 0
    %344 = vmatpush2.bf16.msra.mxu0 0
    %345 = vmatprep.mubr.bf16.mxu0 0
    %346 = vmatmul.mubr.bf16.gmra.mxu0 %v244
    %v347 = vpop.f32.mrf.mxu0
    %v348 = vadd.f32 %v264, %v347
    %v349 = vpop.f32.mrf.mxu0
    %v350 = vpop.f32.mrf.mxu0
    %v351 = vpop.f32.mrf.mxu0
    %352 = vdwg.mxu0
    %v353 = vmax.f32 %v348, 0.0
    %v354 = vpack.c.bf16 %v353, %v353
    %s355 = scalar_lea.vmem [#allocation6], 64
    %v356 = vld [vmem:[%s355] sm:$0xf]
    %v357 = vld [vmem:[%s355 + $0x4] sm:$0xf]
    %v358 = vld [vmem:[%s355 + $0x8] sm:$0xf]
    %v359 = vld [vmem:[%s355 + $0xc] sm:$0xf]
    %v360 = vld [vmem:[%s355 + $0x10] sm:$0xf]
    %v361 = vld [vmem:[%s355 + $0x14] sm:$0xf]
    %v362 = vld [vmem:[%s355 + $0x18] sm:$0xf]
    %v363 = vld [vmem:[%s355 + $0x1c] sm:$0xf]
    %v364 = vld [vmem:[%s355 + $0x20] sm:$0xf]
    %v365 = vld [vmem:[%s355 + $0x24] sm:$0xf]
    %v366 = vld [vmem:[%s355 + $0x28] sm:$0xf]
    %v367 = vld [vmem:[%s355 + $0x2c] sm:$0xf]
    %v368 = vld [vmem:[%s355 + $0x30] sm:$0xf]
    %v369 = vld [vmem:[%s355 + $0x34] sm:$0xf]
    %v370 = vld [vmem:[%s355 + $0x38] sm:$0xf]
    %v371 = vld [vmem:[%s355 + $0x3c] sm:$0xf]
    %v372 = vlaneseq
    %v373 = vshrl.u32 %v372, 7
    %v374 = vsub.s32 1, %v373
    %v375 = vrot.slane %v242, %v374
    %v392 = vunpack.c.l.b16 %v356
    %v393 = vunpack.c.l.b16 %v357
    %v394 = vunpack.c.l.b16 %v358
    %v395 = vunpack.c.l.b16 %v359
    %v396 = vunpack.c.l.b16 %v360
    %v397 = vunpack.c.l.b16 %v361
    %v398 = vunpack.c.l.b16 %v362
    %v399 = vunpack.c.l.b16 %v363
    %v400 = vunpack.c.l.b16 %v364
    %v401 = vunpack.c.l.b16 %v365
    %v402 = vunpack.c.l.b16 %v366
    %v403 = vunpack.c.l.b16 %v367
    %v404 = vunpack.c.l.b16 %v368
    %v405 = vunpack.c.l.b16 %v369
    %v406 = vunpack.c.l.b16 %v370
    %v407 = vunpack.c.l.b16 %v371
    %v408 = vpack.c.b16 %v393, %v392
    %v409 = vpack.c.b16 %v395, %v394
    %v410 = vpack.c.b16 %v397, %v396
    %v411 = vpack.c.b16 %v399, %v398
    %v412 = vpack.c.b16 %v401, %v400
    %v413 = vpack.c.b16 %v403, %v402
    %v414 = vpack.c.b16 %v405, %v404
    %v415 = vpack.c.b16 %v407, %v406
    %424 = vmatprep.subr.bf16.mxu0 0
    %425 = vmatpush1.bf16.msra.mxu0 %v415
    %426 = vmatprep.subr.bf16.mxu0 0
    %427 = vmatpush1.bf16.msra.mxu0 %v414
    %428 = vmatprep.subr.bf16.mxu0 0
    %429 = vmatpush1.bf16.msra.mxu0 %v413
    %430 = vmatprep.subr.bf16.mxu0 0
    %431 = vmatpush1.bf16.msra.mxu0 %v412
    %432 = vmatprep.subr.bf16.mxu0 0
    %433 = vmatpush1.bf16.msra.mxu0 %v411
    %434 = vmatprep.subr.bf16.mxu0 0
    %435 = vmatpush1.bf16.msra.mxu0 %v410
    %436 = vmatprep.subr.bf16.mxu0 0
    %437 = vmatpush1.bf16.msra.mxu0 %v409
    %438 = vmatprep.subr.bf16.mxu0 0
    %439 = vmatpush1.bf16.msra.mxu0 %v408
    %440 = vmatprep.subr.bf16.mxu0 0
    %441 = vmatpush2.bf16.msra.mxu0 0
    %442 = vmatprep.subr.bf16.mxu0 0
    %443 = vmatpush2.bf16.msra.mxu0 0
    %444 = vmatprep.subr.bf16.mxu0 0
    %445 = vmatpush2.bf16.msra.mxu0 0
    %446 = vmatprep.subr.bf16.mxu0 0
    %447 = vmatpush2.bf16.msra.mxu0 0
    %448 = vmatprep.subr.bf16.mxu0 0
    %449 = vmatpush2.bf16.msra.mxu0 0
    %450 = vmatprep.subr.bf16.mxu0 0
    %451 = vmatpush2.bf16.msra.mxu0 0
    %452 = vmatprep.subr.bf16.mxu0 0
    %453 = vmatpush2.bf16.msra.mxu0 0
    %454 = vmatprep.subr.bf16.mxu0 0
    %455 = vmatpush2.bf16.msra.mxu0 0
    %456 = vmatprep.mubr.bf16.mxu0 0
    %457 = vmatmul.mubr.bf16.gmra.mxu0 %v354
    %v458 = vpop.f32.mrf.mxu0
    %v459 = vadd.f32 %v375, %v458
    %v460 = vpop.f32.mrf.mxu0
    %v461 = vpop.f32.mrf.mxu0
    %v462 = vpop.f32.mrf.mxu0
    %463 = vdwg.mxu0
    %v464 = vpack.c.bf16 %v459, %v459
    %v465 = vld [vmem:[#allocation7] sm:$0xf]
    %v466 = vld [vmem:[#allocation7 + $0x4] sm:$0xf]
    %v467 = vld [vmem:[#allocation7 + $0x8] sm:$0xf]
    %v468 = vld [vmem:[#allocation7 + $0xc] sm:$0xf]
    %v469 = vld [vmem:[#allocation7 + $0x10] sm:$0xf]
    %v470 = vld [vmem:[#allocation7 + $0x14] sm:$0xf]
    %v471 = vld [vmem:[#allocation7 + $0x18] sm:$0xf]
    %v472 = vld [vmem:[#allocation7 + $0x1c] sm:$0xf]
    %v473 = vld [vmem:[#allocation7 + $0x20] sm:$0xf]
    %v474 = vld [vmem:[#allocation7 + $0x24] sm:$0xf]
    %v475 = vld [vmem:[#allocation7 + $0x28] sm:$0xf]
    %v476 = vld [vmem:[#allocation7 + $0x2c] sm:$0xf]
    %v477 = vld [vmem:[#allocation7 + $0x30] sm:$0xf]
    %v478 = vld [vmem:[#allocation7 + $0x34] sm:$0xf]
    %v479 = vld [vmem:[#allocation7 + $0x38] sm:$0xf]
    %v480 = vld [vmem:[#allocation7 + $0x3c] sm:$0xf]
    %v481 = vld [vmem:[%s6] sm:$0x1]
    %v483 = vlaneseq
    %v484 = vshrl.u32 %v483, 7
    %v485 = vsub.s32 0, %v484
    %v486 = vrot.slane %v481, %v485
    %v504 = vunpack.c.l.b16 %v465
    %v505 = vunpack.c.l.b16 %v466
    %v506 = vunpack.c.l.b16 %v467
    %v507 = vunpack.c.l.b16 %v468
    %v508 = vunpack.c.l.b16 %v469
    %v509 = vunpack.c.l.b16 %v470
    %v510 = vunpack.c.l.b16 %v471
    %v511 = vunpack.c.l.b16 %v472
    %v512 = vunpack.c.l.b16 %v473
    %v513 = vunpack.c.l.b16 %v474
    %v514 = vunpack.c.l.b16 %v475
    %v515 = vunpack.c.l.b16 %v476
    %v516 = vunpack.c.l.b16 %v477
    %v517 = vunpack.c.l.b16 %v478
    %v518 = vunpack.c.l.b16 %v479
    %v519 = vunpack.c.l.b16 %v480
    %v520 = vpack.c.b16 %v505, %v504
    %v521 = vpack.c.b16 %v507, %v506
    %v522 = vpack.c.b16 %v509, %v508
    %v523 = vpack.c.b16 %v511, %v510
    %v524 = vpack.c.b16 %v513, %v512
    %v525 = vpack.c.b16 %v515, %v514
    %v526 = vpack.c.b16 %v517, %v516
    %v527 = vpack.c.b16 %v519, %v518
    %536 = vmatprep.subr.bf16.mxu0 0
    %537 = vmatpush1.bf16.msra.mxu0 %v527
    %538 = vmatprep.subr.bf16.mxu0 0
    %539 = vmatpush1.bf16.msra.mxu0 %v526
    %540 = vmatprep.subr.bf16.mxu0 0
    %541 = vmatpush1.bf16.msra.mxu0 %v525
    %542 = vmatprep.subr.bf16.mxu0 0
    %543 = vmatpush1.bf16.msra.mxu0 %v524
    %544 = vmatprep.subr.bf16.mxu0 0
    %545 = vmatpush1.bf16.msra.mxu0 %v523
    %546 = vmatprep.subr.bf16.mxu0 0
    %547 = vmatpush1.bf16.msra.mxu0 %v522
    %548 = vmatprep.subr.bf16.mxu0 0
    %549 = vmatpush1.bf16.msra.mxu0 %v521
    %550 = vmatprep.subr.bf16.mxu0 0
    %551 = vmatpush1.bf16.msra.mxu0 %v520
    %552 = vmatprep.subr.bf16.mxu0 0
    %553 = vmatpush2.bf16.msra.mxu0 0
    %554 = vmatprep.subr.bf16.mxu0 0
    %555 = vmatpush2.bf16.msra.mxu0 0
    %556 = vmatprep.subr.bf16.mxu0 0
    %557 = vmatpush2.bf16.msra.mxu0 0
    %558 = vmatprep.subr.bf16.mxu0 0
    %559 = vmatpush2.bf16.msra.mxu0 0
    %560 = vmatprep.subr.bf16.mxu0 0
    %561 = vmatpush2.bf16.msra.mxu0 0
    %562 = vmatprep.subr.bf16.mxu0 0
    %563 = vmatpush2.bf16.msra.mxu0 0
    %564 = vmatprep.subr.bf16.mxu0 0
    %565 = vmatpush2.bf16.msra.mxu0 0
    %566 = vmatprep.subr.bf16.mxu0 0
    %567 = vmatpush2.bf16.msra.mxu0 0
    %568 = vmatprep.mubr.bf16.mxu0 0
    %569 = vmatmul.mubr.bf16.gmra.mxu0 %v464
    %v570 = vpop.f32.mrf.mxu0
    %v571 = vadd.f32 %v486, %v570
    %v572 = vpop.f32.mrf.mxu0
    %v573 = vpop.f32.mrf.mxu0
    %v574 = vpop.f32.mrf.mxu0
    %575 = vdwg.mxu0
    %576 = vst [vmem:[%s7] sm:$0xff] %v571
    // Predicated region
    $region46: #{rnd_forward.1} parent=1 // pred_check
      _
    $region47: #{rnd_forward.1} parent=1 // pred_check_branch
      %578 = sbr.rel (0) target = $region49
    $region48: #{rnd_forward.1} parent=1 // pred_region
      _
    $region49: #{rnd_forward.1} parent=1 // pred_fallthru
      _
    // Predicated region
    $region50: #{rnd_forward.1} parent=1 // pred_check
      _
    $region51: #{rnd_forward.1} parent=1 // pred_check_branch
      %580 = sbr.rel (0) target = $region53
    $region52: #{rnd_forward.1} parent=1 // pred_region
      _
    $region53: #{rnd_forward.1} parent=1 // pred_fallthru
      _
    %581 = vsyncpa [#allocation3], 1
    %582 = vsyncpa [#allocation5], 1
    %583 = vsyncpa [#allocation8], 1

</llo_original>
